<compile_context>
chip_gen: v7x
topology: tpu7x:2x2x1
jax: 0.10.0
libtpu: 0.0.40
codegen_flags: <defaults>
</compile_context>

<pallas_src>
import functools

import jax
import jax.numpy as jnp
from jax.experimental import pallas as pl

# ----------------------------- configuration ------------------------------
WIDTH = 32        # d_model
NHEAD = 8
DIM = WIDTH // NHEAD
ATTN_DEPTH = 2    # number of (weight-shared) encoder layers
BATCH = 2
SEQ = 16

LN_EPS = 1e-5     # torch.nn.LayerNorm default
ATTN_EPS = 1e-6   # linear-attention denominator epsilon


# ------------------------------ Pallas kernel ------------------------------
def _make_view_transformer_kernel(depth: int, n_batch: int, seq_len: int,
                                  d_model: int):
    """Full ViewTransformer forward (all `depth` shared-weight layers), one call."""
    C = d_model
    L = seq_len

    def layernorm(y, gamma, beta):
        mu = jnp.mean(y, axis=-1, keepdims=True)
        var = jnp.mean((y - mu) ** 2, axis=-1, keepdims=True)
        return (y - mu) * jax.lax.rsqrt(var + LN_EPS) * gamma + beta

    def kernel(x_ref, w_ref, w2_ref, nrm_ref, mask2_ref, o_ref):
        # x_ref   : [N*L, C]    activations (batch folded into rows)
        # w_ref   : [C, 8C]     [wq | wk | wv | wm | w1_top | w1_bot]
        # w2_ref  : [2C, C]
        # nrm_ref : [4, C]      [gamma1; beta1; gamma2; beta2]
        # mask2_ref: [C, 2C]    [head_mask | head_mask] (block-diagonal heads)
        x = x_ref[...]                              # [N*L, C], f32
        mask2 = mask2_ref[...]                      # [C, 2C]
        ones_lc = jnp.ones((L, C), jnp.float32)     # for the K-sum-via-matmul trick

        for _ in range(depth):                      # layers share one weight set
            # Fused Q/K/V projection: one [N*L, C] @ [C, 3C] MXU matmul.
            qkv = jnp.dot(x, w_ref[:, 0:3 * C],
                          preferred_element_type=jnp.float32)
            q = qkv[:, 0:C]
            k = qkv[:, C:2 * C]
            v = qkv[:, 2 * C:3 * C]

            # elu(t) + 1 feature map, exact; clamp so the unselected exp branch
            # never overflows to inf.
            Q = jnp.where(q > 0, q + 1.0, jnp.exp(jnp.minimum(q, 0.0)))
            K = jnp.where(k > 0, k + 1.0, jnp.exp(jnp.minimum(k, 0.0)))

            # Linear attention in block-diagonal-head form.  Only this step is
            # per-batch (static 2-iteration loop); everything else is folded.
            msgs = []
            for b in range(n_batch):
                rows = slice(b * L, (b + 1) * L)
                Qb = Q[rows]
                Kb = K[rows]
                Vb = v[rows]
                # R = Kb^T @ [Vb | 1]  ->  [C, 2C]
                #   left  block: K^T V          (per-channel-pair sums)
                #   right block: sum_s K[s, :]  broadcast across all columns
                Vcat = jnp.concatenate([Vb, ones_lc], axis=1)      # [L, 2C]
                R = jax.lax.dot_general(
                    Kb, Vcat, (((0,), (0,)), ((), ())),
                    preferred_element_type=jnp.float32)            # [C, 2C]
                # One fused matmul produces numerator and denominator.
                P = jnp.dot(Qb, R * mask2,
                            preferred_element_type=jnp.float32)    # [L, 2C]
                num = P[:, 0:C]
                den = P[:, C:2 * C]
                msgs.append(num * pl.reciprocal(den + ATTN_EPS, approx=True))
            message = jnp.concatenate(msgs, axis=0)                # [N*L, C]

            # merge linear + LayerNorm1 (dropout layers are identity in eval).
            message = jnp.dot(message, w_ref[:, 3 * C:4 * C],
                              preferred_element_type=jnp.float32)
            message = layernorm(message, nrm_ref[0:1, :], nrm_ref[1:2, :])

            # MLP on cat([x, message]) without the lane concat:
            #   hid = x @ w1_top + message @ w1_bot ; LeakyReLU(0.1) ; @ w2
            hid = (jnp.dot(x, w_ref[:, 4 * C:6 * C],
                           preferred_element_type=jnp.float32)
                   + jnp.dot(message, w_ref[:, 6 * C:8 * C],
                             preferred_element_type=jnp.float32))
            hid = jnp.where(hid > 0, hid, 0.1 * hid)
            m = jnp.dot(hid, w2_ref[...], preferred_element_type=jnp.float32)
            m = layernorm(m, nrm_ref[2:3, :], nrm_ref[3:4, :])

            # residual (rezero disabled)
            x = x + m

        o_ref[...] = x

    return kernel


@functools.partial(jax.jit, static_argnames=("depth",))
def view_transformer_pallas(x, params, depth=ATTN_DEPTH):
    """Full ViewTransformer via one pallas_call (no grid — single invocation)."""
    N, L, C = x.shape

    # Pack parameters into three slabs (one DMA each) + one static mask.
    w1 = params["w1"]
    w_slab = jnp.concatenate(
        [params["wq"], params["wk"], params["wv"], params["wm"],
         w1[:C, :], w1[C:, :]], axis=1)                            # [C, 8C]
    norms = jnp.concatenate(
        [params["g1"], params["b1"], params["g2"], params["b2"]], axis=0)  # [4, C]
    head = jnp.arange(C, dtype=jnp.int32) // (C // NHEAD)
    hmask = (head[:, None] == head[None, :]).astype(jnp.float32)   # [C, C]
    mask2 = jnp.concatenate([hmask, hmask], axis=1)                 # [C, 2C]

    kernel = _make_view_transformer_kernel(depth, N, L, C)
    out2d = pl.pallas_call(
        kernel,
        out_shape=jax.ShapeDtypeStruct((N * L, C), jnp.float32),
    )(x.reshape(N * L, C), w_slab, params["w2"], norms, mask2)
    return out2d.reshape(N, L, C)


# --------------------------- pure-JAX reference ----------------------------
def _ref_layernorm(y, gamma, beta):
    mu = jnp.mean(y, axis=-1, keepdims=True)
    var = jnp.mean((y - mu) ** 2, axis=-1, keepdims=True)
    return (y - mu) * jax.lax.rsqrt(var + LN_EPS) * gamma + beta


def view_transformer_ref(x, params, depth=ATTN_DEPTH):
    N, L, C = x.shape
    H, D = NHEAD, DIM
    for _ in range(depth):
        q = (x @ params["wq"]).reshape(N, L, H, D)
        k = (x @ params["wk"]).reshape(N, L, H, D)
        v = (x @ params["wv"]).reshape(N, L, H, D)
        Q = jax.nn.elu(q) + 1.0
        K = jax.nn.elu(k) + 1.0
        values = v / L
        KV = jnp.einsum("nshd,nshv->nhdv", K, values)
        Z = 1.0 / (jnp.einsum("nlhd,nhd->nlh", Q, K.sum(axis=1)) + ATTN_EPS)
        msg = jnp.einsum("nlhd,nhdv,nlh->nlhv", Q, KV, Z) * L
        msg = msg.reshape(N, L, C) @ params["wm"]
        msg = _ref_layernorm(msg, params["g1"], params["b1"])
        cat = jnp.concatenate([x, msg], axis=-1)
        hid = cat @ params["w1"]
        hid = jnp.where(hid > 0, hid, 0.1 * hid)
        m = hid @ params["w2"]
        m = _ref_layernorm(m, params["g2"], params["b2"])
        x = x + m
    return x


# ------------------------------ param init ---------------------------------
def init_params(key, d_model):
    def xavier(key, fan_in, fan_out):
        a = (6.0 / (fan_in + fan_out)) ** 0.5
        return jax.random.uniform(key, (fan_in, fan_out), jnp.float32, -a, a)

    ks = jax.random.split(key, 6)
    return {
        "wq": xavier(ks[0], d_model, d_model),
        "wk": xavier(ks[1], d_model, d_model),
        "wv": xavier(ks[2], d_model, d_model),
        "wm": xavier(ks[3], d_model, d_model),
        "g1": jnp.ones((1, d_model), jnp.float32),
        "b1": jnp.zeros((1, d_model), jnp.float32),
        "w1": xavier(ks[4], 2 * d_model, 2 * d_model),
        "w2": xavier(ks[5], 2 * d_model, d_model),
        "g2": jnp.ones((1, d_model), jnp.float32),
        "b2": jnp.zeros((1, d_model), jnp.float32),
    }


# ----------------------------------- main -----------------------------------
if __name__ == "__main__":
    key = jax.random.PRNGKey(0)
    kx, kp = jax.random.split(key)
    x = jax.random.normal(kx, (BATCH, SEQ, WIDTH), jnp.float32)
    params = init_params(kp, WIDTH)

    out = jax.block_until_ready(view_transformer_pallas(x, params))

    # Reference in full f32 matmul precision so parity checking is not clouded
    # by XLA's default (bf16) matmul passes on TPU.
    with jax.default_matmul_precision("highest"):
        ref = view_transformer_ref(x, params)
    ref = jax.block_until_ready(ref)

    assert out.shape == (BATCH, SEQ, WIDTH)
    assert bool(jnp.all(jnp.isfinite(out)))
    assert bool(jnp.allclose(out, ref, rtol=1e-2, atol=1e-2)), \
        "mismatch vs JAX reference"

    print("KERNEL_OK")
</pallas_src>

<mosaic_0001>
module attributes {stable_mosaic.version = 11 : i64} {
  func.func @kernel(%arg0: memref<32x32xf32, #tpu.memory_space<vmem>>, %arg1: memref<32x256xf32, #tpu.memory_space<vmem>>, %arg2: memref<64x32xf32, #tpu.memory_space<vmem>>, %arg3: memref<4x32xf32, #tpu.memory_space<vmem>>, %arg4: memref<32x64xf32, #tpu.memory_space<vmem>>, %arg5: memref<32x32xf32, #tpu.memory_space<vmem>>) attributes {dimension_semantics = [], scalar_prefetch = 0 : i64, scratch_operands = 0 : i64, tpu.core_type = #tpu.core_type<tc>} {
    %c0 = arith.constant 0 : index
    %c0_0 = arith.constant 0 : index
    %0 = vector.load %arg0[%c0, %c0_0] : memref<32x32xf32, #tpu.memory_space<vmem>>, vector<32x32xf32>
    %c0_1 = arith.constant 0 : index
    %c0_2 = arith.constant 0 : index
    %1 = vector.load %arg4[%c0_1, %c0_2] : memref<32x64xf32, #tpu.memory_space<vmem>>, vector<32x64xf32>
    %cst = arith.constant 1.000000e+00 : f32
    %2 = vector.broadcast %cst : f32 to vector<16x32xf32>
    %c0_3 = arith.constant 0 : index
    %c0_4 = arith.constant 0 : index
    %3 = vector.load %arg1[%c0_3, %c0_4] : memref<32x256xf32, #tpu.memory_space<vmem>>, vector<32x96xf32>
    %cst_5 = arith.constant dense<0.000000e+00> : vector<32x96xf32>
    %4 = tpu.matmul %0, %3, %cst_5 {dimension_numbers = #tpu.dot_dimension_numbers<[1], [0], [0], [1], [0, 0, 1, 1], [], []>} : vector<32x32xf32>, vector<32x96xf32>, vector<32x96xf32> -> vector<32x96xf32>
    %5 = vector.extract_strided_slice %4 {offsets = [0, 0], sizes = [32, 32], strides = [1, 1]} : vector<32x96xf32> to vector<32x32xf32>
    %6 = vector.extract_strided_slice %4 {offsets = [0, 32], sizes = [32, 32], strides = [1, 1]} : vector<32x96xf32> to vector<32x32xf32>
    %7 = vector.extract_strided_slice %4 {offsets = [0, 64], sizes = [32, 32], strides = [1, 1]} : vector<32x96xf32> to vector<32x32xf32>
    %cst_6 = arith.constant 0.000000e+00 : f32
    %8 = vector.broadcast %cst_6 : f32 to vector<32x32xf32>
    %9 = arith.cmpf ogt, %5, %8 : vector<32x32xf32>
    %cst_7 = arith.constant 1.000000e+00 : f32
    %10 = vector.broadcast %cst_7 : f32 to vector<32x32xf32>
    %11 = arith.addf %5, %10 : vector<32x32xf32>
    %cst_8 = arith.constant 0.000000e+00 : f32
    %12 = vector.broadcast %cst_8 : f32 to vector<32x32xf32>
    %13 = arith.minimumf %5, %12 : vector<32x32xf32>
    %14 = math.exp %13 : vector<32x32xf32>
    %15 = arith.select %9, %11, %14 : vector<32x32xi1>, vector<32x32xf32>
    %cst_9 = arith.constant 0.000000e+00 : f32
    %16 = vector.broadcast %cst_9 : f32 to vector<32x32xf32>
    %17 = arith.cmpf ogt, %6, %16 : vector<32x32xf32>
    %cst_10 = arith.constant 1.000000e+00 : f32
    %18 = vector.broadcast %cst_10 : f32 to vector<32x32xf32>
    %19 = arith.addf %6, %18 : vector<32x32xf32>
    %cst_11 = arith.constant 0.000000e+00 : f32
    %20 = vector.broadcast %cst_11 : f32 to vector<32x32xf32>
    %21 = arith.minimumf %6, %20 : vector<32x32xf32>
    %22 = math.exp %21 : vector<32x32xf32>
    %23 = arith.select %17, %19, %22 : vector<32x32xi1>, vector<32x32xf32>
    %24 = vector.extract_strided_slice %15 {offsets = [0, 0], sizes = [16, 32], strides = [1, 1]} : vector<32x32xf32> to vector<16x32xf32>
    %25 = vector.extract_strided_slice %23 {offsets = [0, 0], sizes = [16, 32], strides = [1, 1]} : vector<32x32xf32> to vector<16x32xf32>
    %26 = vector.extract_strided_slice %7 {offsets = [0, 0], sizes = [16, 32], strides = [1, 1]} : vector<32x32xf32> to vector<16x32xf32>
    %27 = tpu.concatenate %26, %2 in 1 : vector<16x32xf32>, vector<16x32xf32> -> vector<16x64xf32>
    %cst_12 = arith.constant dense<0.000000e+00> : vector<32x64xf32>
    %28 = tpu.matmul %25, %27, %cst_12 {dimension_numbers = #tpu.dot_dimension_numbers<[0], [0], [1], [1], [0, 1, 1, 1], [], []>} : vector<16x32xf32>, vector<16x64xf32>, vector<32x64xf32> -> vector<32x64xf32>
    %29 = arith.mulf %28, %1 : vector<32x64xf32>
    %cst_13 = arith.constant dense<0.000000e+00> : vector<16x64xf32>
    %30 = tpu.matmul %24, %29, %cst_13 {dimension_numbers = #tpu.dot_dimension_numbers<[1], [0], [0], [1], [0, 0, 1, 1], [], []>} : vector<16x32xf32>, vector<32x64xf32>, vector<16x64xf32> -> vector<16x64xf32>
    %31 = vector.extract_strided_slice %30 {offsets = [0, 0], sizes = [16, 32], strides = [1, 1]} : vector<16x64xf32> to vector<16x32xf32>
    %32 = vector.extract_strided_slice %30 {offsets = [0, 32], sizes = [16, 32], strides = [1, 1]} : vector<16x64xf32> to vector<16x32xf32>
    %cst_14 = arith.constant 9.99999997E-7 : f32
    %33 = vector.broadcast %cst_14 : f32 to vector<16x32xf32>
    %34 = arith.addf %32, %33 : vector<16x32xf32>
    %35 = tpu.reciprocal %34 {approx = true} : vector<16x32xf32> -> vector<16x32xf32>
    %36 = arith.mulf %31, %35 : vector<16x32xf32>
    %37 = vector.extract_strided_slice %15 {offsets = [16, 0], sizes = [16, 32], strides = [1, 1]} : vector<32x32xf32> to vector<16x32xf32>
    %38 = vector.extract_strided_slice %23 {offsets = [16, 0], sizes = [16, 32], strides = [1, 1]} : vector<32x32xf32> to vector<16x32xf32>
    %39 = vector.extract_strided_slice %7 {offsets = [16, 0], sizes = [16, 32], strides = [1, 1]} : vector<32x32xf32> to vector<16x32xf32>
    %40 = tpu.concatenate %39, %2 in 1 : vector<16x32xf32>, vector<16x32xf32> -> vector<16x64xf32>
    %cst_15 = arith.constant dense<0.000000e+00> : vector<32x64xf32>
    %41 = tpu.matmul %38, %40, %cst_15 {dimension_numbers = #tpu.dot_dimension_numbers<[0], [0], [1], [1], [0, 1, 1, 1], [], []>} : vector<16x32xf32>, vector<16x64xf32>, vector<32x64xf32> -> vector<32x64xf32>
    %42 = arith.mulf %41, %1 : vector<32x64xf32>
    %cst_16 = arith.constant dense<0.000000e+00> : vector<16x64xf32>
    %43 = tpu.matmul %37, %42, %cst_16 {dimension_numbers = #tpu.dot_dimension_numbers<[1], [0], [0], [1], [0, 0, 1, 1], [], []>} : vector<16x32xf32>, vector<32x64xf32>, vector<16x64xf32> -> vector<16x64xf32>
    %44 = vector.extract_strided_slice %43 {offsets = [0, 0], sizes = [16, 32], strides = [1, 1]} : vector<16x64xf32> to vector<16x32xf32>
    %45 = vector.extract_strided_slice %43 {offsets = [0, 32], sizes = [16, 32], strides = [1, 1]} : vector<16x64xf32> to vector<16x32xf32>
    %cst_17 = arith.constant 9.99999997E-7 : f32
    %46 = vector.broadcast %cst_17 : f32 to vector<16x32xf32>
    %47 = arith.addf %45, %46 : vector<16x32xf32>
    %48 = tpu.reciprocal %47 {approx = true} : vector<16x32xf32> -> vector<16x32xf32>
    %49 = arith.mulf %44, %48 : vector<16x32xf32>
    %50 = tpu.concatenate %36, %49 in 0 : vector<16x32xf32>, vector<16x32xf32> -> vector<32x32xf32>
    %c0_18 = arith.constant 0 : index
    %c96 = arith.constant 96 : index
    %51 = vector.load %arg1[%c0_18, %c96] : memref<32x256xf32, #tpu.memory_space<vmem>>, vector<32x32xf32>
    %cst_19 = arith.constant dense<0.000000e+00> : vector<32x32xf32>
    %52 = tpu.matmul %50, %51, %cst_19 {dimension_numbers = #tpu.dot_dimension_numbers<[1], [0], [0], [1], [0, 0, 1, 1], [], []>} : vector<32x32xf32>, vector<32x32xf32>, vector<32x32xf32> -> vector<32x32xf32>
    %c0_20 = arith.constant 0 : index
    %c0_21 = arith.constant 0 : index
    %53 = vector.load %arg3[%c0_20, %c0_21] : memref<4x32xf32, #tpu.memory_space<vmem>>, vector<1x32xf32>
    %c1 = arith.constant 1 : index
    %c0_22 = arith.constant 0 : index
    %54 = vector.load %arg3[%c1, %c0_22] : memref<4x32xf32, #tpu.memory_space<vmem>>, vector<1x32xf32>
    %cst_23 = arith.constant dense<0.000000e+00> : vector<32xf32>
    %55 = vector.multi_reduction <add>, %52, %cst_23 [1] : vector<32x32xf32> to vector<32xf32>
    %56 = vector.shape_cast %55 : vector<32xf32> to vector<32x1xf32>
    %cst_24 = arith.constant 3.200000e+01 : f32
    %57 = vector.broadcast %cst_24 : f32 to vector<32x1xf32>
    %58 = arith.divf %56, %57 : vector<32x1xf32>
    %59 = vector.broadcast %58 : vector<32x1xf32> to vector<32x32xf32>
    %60 = arith.subf %52, %59 : vector<32x32xf32>
    %61 = arith.mulf %60, %60 : vector<32x32xf32>
    %cst_25 = arith.constant dense<0.000000e+00> : vector<32xf32>
    %62 = vector.multi_reduction <add>, %61, %cst_25 [1] : vector<32x32xf32> to vector<32xf32>
    %63 = vector.shape_cast %62 : vector<32xf32> to vector<32x1xf32>
    %cst_26 = arith.constant 3.200000e+01 : f32
    %64 = vector.broadcast %cst_26 : f32 to vector<32x1xf32>
    %65 = arith.divf %63, %64 : vector<32x1xf32>
    %66 = vector.broadcast %58 : vector<32x1xf32> to vector<32x32xf32>
    %67 = arith.subf %52, %66 : vector<32x32xf32>
    %cst_27 = arith.constant 9.99999974E-6 : f32
    %68 = vector.broadcast %cst_27 : f32 to vector<32x1xf32>
    %69 = arith.addf %65, %68 : vector<32x1xf32>
    %70 = math.rsqrt %69 : vector<32x1xf32>
    %71 = vector.broadcast %70 : vector<32x1xf32> to vector<32x32xf32>
    %72 = arith.mulf %67, %71 : vector<32x32xf32>
    %73 = vector.broadcast %53 : vector<1x32xf32> to vector<32x32xf32>
    %74 = arith.mulf %72, %73 : vector<32x32xf32>
    %75 = vector.broadcast %54 : vector<1x32xf32> to vector<32x32xf32>
    %76 = arith.addf %74, %75 : vector<32x32xf32>
    %c0_28 = arith.constant 0 : index
    %c128 = arith.constant 128 : index
    %77 = vector.load %arg1[%c0_28, %c128] : memref<32x256xf32, #tpu.memory_space<vmem>>, vector<32x64xf32>
    %cst_29 = arith.constant dense<0.000000e+00> : vector<32x64xf32>
    %78 = tpu.matmul %0, %77, %cst_29 {dimension_numbers = #tpu.dot_dimension_numbers<[1], [0], [0], [1], [0, 0, 1, 1], [], []>} : vector<32x32xf32>, vector<32x64xf32>, vector<32x64xf32> -> vector<32x64xf32>
    %c0_30 = arith.constant 0 : index
    %c192 = arith.constant 192 : index
    %79 = vector.load %arg1[%c0_30, %c192] : memref<32x256xf32, #tpu.memory_space<vmem>>, vector<32x64xf32>
    %cst_31 = arith.constant dense<0.000000e+00> : vector<32x64xf32>
    %80 = tpu.matmul %76, %79, %cst_31 {dimension_numbers = #tpu.dot_dimension_numbers<[1], [0], [0], [1], [0, 0, 1, 1], [], []>} : vector<32x32xf32>, vector<32x64xf32>, vector<32x64xf32> -> vector<32x64xf32>
    %81 = arith.addf %78, %80 : vector<32x64xf32>
    %cst_32 = arith.constant 0.000000e+00 : f32
    %82 = vector.broadcast %cst_32 : f32 to vector<32x64xf32>
    %83 = arith.cmpf ogt, %81, %82 : vector<32x64xf32>
    %cst_33 = arith.constant 1.000000e-01 : f32
    %84 = vector.broadcast %cst_33 : f32 to vector<32x64xf32>
    %85 = arith.mulf %84, %81 : vector<32x64xf32>
    %86 = arith.select %83, %81, %85 : vector<32x64xi1>, vector<32x64xf32>
    %c0_34 = arith.constant 0 : index
    %c0_35 = arith.constant 0 : index
    %87 = vector.load %arg2[%c0_34, %c0_35] : memref<64x32xf32, #tpu.memory_space<vmem>>, vector<64x32xf32>
    %cst_36 = arith.constant dense<0.000000e+00> : vector<32x32xf32>
    %88 = tpu.matmul %86, %87, %cst_36 {dimension_numbers = #tpu.dot_dimension_numbers<[1], [0], [0], [1], [0, 0, 1, 1], [], []>} : vector<32x64xf32>, vector<64x32xf32>, vector<32x32xf32> -> vector<32x32xf32>
    %c2 = arith.constant 2 : index
    %c0_37 = arith.constant 0 : index
    %89 = vector.load %arg3[%c2, %c0_37] : memref<4x32xf32, #tpu.memory_space<vmem>>, vector<1x32xf32>
    %c3 = arith.constant 3 : index
    %c0_38 = arith.constant 0 : index
    %90 = vector.load %arg3[%c3, %c0_38] : memref<4x32xf32, #tpu.memory_space<vmem>>, vector<1x32xf32>
    %cst_39 = arith.constant dense<0.000000e+00> : vector<32xf32>
    %91 = vector.multi_reduction <add>, %88, %cst_39 [1] : vector<32x32xf32> to vector<32xf32>
    %92 = vector.shape_cast %91 : vector<32xf32> to vector<32x1xf32>
    %cst_40 = arith.constant 3.200000e+01 : f32
    %93 = vector.broadcast %cst_40 : f32 to vector<32x1xf32>
    %94 = arith.divf %92, %93 : vector<32x1xf32>
    %95 = vector.broadcast %94 : vector<32x1xf32> to vector<32x32xf32>
    %96 = arith.subf %88, %95 : vector<32x32xf32>
    %97 = arith.mulf %96, %96 : vector<32x32xf32>
    %cst_41 = arith.constant dense<0.000000e+00> : vector<32xf32>
    %98 = vector.multi_reduction <add>, %97, %cst_41 [1] : vector<32x32xf32> to vector<32xf32>
    %99 = vector.shape_cast %98 : vector<32xf32> to vector<32x1xf32>
    %cst_42 = arith.constant 3.200000e+01 : f32
    %100 = vector.broadcast %cst_42 : f32 to vector<32x1xf32>
    %101 = arith.divf %99, %100 : vector<32x1xf32>
    %102 = vector.broadcast %94 : vector<32x1xf32> to vector<32x32xf32>
    %103 = arith.subf %88, %102 : vector<32x32xf32>
    %cst_43 = arith.constant 9.99999974E-6 : f32
    %104 = vector.broadcast %cst_43 : f32 to vector<32x1xf32>
    %105 = arith.addf %101, %104 : vector<32x1xf32>
    %106 = math.rsqrt %105 : vector<32x1xf32>
    %107 = vector.broadcast %106 : vector<32x1xf32> to vector<32x32xf32>
    %108 = arith.mulf %103, %107 : vector<32x32xf32>
    %109 = vector.broadcast %89 : vector<1x32xf32> to vector<32x32xf32>
    %110 = arith.mulf %108, %109 : vector<32x32xf32>
    %111 = vector.broadcast %90 : vector<1x32xf32> to vector<32x32xf32>
    %112 = arith.addf %110, %111 : vector<32x32xf32>
    %113 = arith.addf %0, %112 : vector<32x32xf32>
    %c0_44 = arith.constant 0 : index
    %c0_45 = arith.constant 0 : index
    %114 = vector.load %arg1[%c0_44, %c0_45] : memref<32x256xf32, #tpu.memory_space<vmem>>, vector<32x96xf32>
    %cst_46 = arith.constant dense<0.000000e+00> : vector<32x96xf32>
    %115 = tpu.matmul %113, %114, %cst_46 {dimension_numbers = #tpu.dot_dimension_numbers<[1], [0], [0], [1], [0, 0, 1, 1], [], []>} : vector<32x32xf32>, vector<32x96xf32>, vector<32x96xf32> -> vector<32x96xf32>
    %116 = vector.extract_strided_slice %115 {offsets = [0, 0], sizes = [32, 32], strides = [1, 1]} : vector<32x96xf32> to vector<32x32xf32>
    %117 = vector.extract_strided_slice %115 {offsets = [0, 32], sizes = [32, 32], strides = [1, 1]} : vector<32x96xf32> to vector<32x32xf32>
    %118 = vector.extract_strided_slice %115 {offsets = [0, 64], sizes = [32, 32], strides = [1, 1]} : vector<32x96xf32> to vector<32x32xf32>
    %cst_47 = arith.constant 0.000000e+00 : f32
    %119 = vector.broadcast %cst_47 : f32 to vector<32x32xf32>
    %120 = arith.cmpf ogt, %116, %119 : vector<32x32xf32>
    %cst_48 = arith.constant 1.000000e+00 : f32
    %121 = vector.broadcast %cst_48 : f32 to vector<32x32xf32>
    %122 = arith.addf %116, %121 : vector<32x32xf32>
    %cst_49 = arith.constant 0.000000e+00 : f32
    %123 = vector.broadcast %cst_49 : f32 to vector<32x32xf32>
    %124 = arith.minimumf %116, %123 : vector<32x32xf32>
    %125 = math.exp %124 : vector<32x32xf32>
    %126 = arith.select %120, %122, %125 : vector<32x32xi1>, vector<32x32xf32>
    %cst_50 = arith.constant 0.000000e+00 : f32
    %127 = vector.broadcast %cst_50 : f32 to vector<32x32xf32>
    %128 = arith.cmpf ogt, %117, %127 : vector<32x32xf32>
    %cst_51 = arith.constant 1.000000e+00 : f32
    %129 = vector.broadcast %cst_51 : f32 to vector<32x32xf32>
    %130 = arith.addf %117, %129 : vector<32x32xf32>
    %cst_52 = arith.constant 0.000000e+00 : f32
    %131 = vector.broadcast %cst_52 : f32 to vector<32x32xf32>
    %132 = arith.minimumf %117, %131 : vector<32x32xf32>
    %133 = math.exp %132 : vector<32x32xf32>
    %134 = arith.select %128, %130, %133 : vector<32x32xi1>, vector<32x32xf32>
    %135 = vector.extract_strided_slice %126 {offsets = [0, 0], sizes = [16, 32], strides = [1, 1]} : vector<32x32xf32> to vector<16x32xf32>
    %136 = vector.extract_strided_slice %134 {offsets = [0, 0], sizes = [16, 32], strides = [1, 1]} : vector<32x32xf32> to vector<16x32xf32>
    %137 = vector.extract_strided_slice %118 {offsets = [0, 0], sizes = [16, 32], strides = [1, 1]} : vector<32x32xf32> to vector<16x32xf32>
    %138 = tpu.concatenate %137, %2 in 1 : vector<16x32xf32>, vector<16x32xf32> -> vector<16x64xf32>
    %cst_53 = arith.constant dense<0.000000e+00> : vector<32x64xf32>
    %139 = tpu.matmul %136, %138, %cst_53 {dimension_numbers = #tpu.dot_dimension_numbers<[0], [0], [1], [1], [0, 1, 1, 1], [], []>} : vector<16x32xf32>, vector<16x64xf32>, vector<32x64xf32> -> vector<32x64xf32>
    %140 = arith.mulf %139, %1 : vector<32x64xf32>
    %cst_54 = arith.constant dense<0.000000e+00> : vector<16x64xf32>
    %141 = tpu.matmul %135, %140, %cst_54 {dimension_numbers = #tpu.dot_dimension_numbers<[1], [0], [0], [1], [0, 0, 1, 1], [], []>} : vector<16x32xf32>, vector<32x64xf32>, vector<16x64xf32> -> vector<16x64xf32>
    %142 = vector.extract_strided_slice %141 {offsets = [0, 0], sizes = [16, 32], strides = [1, 1]} : vector<16x64xf32> to vector<16x32xf32>
    %143 = vector.extract_strided_slice %141 {offsets = [0, 32], sizes = [16, 32], strides = [1, 1]} : vector<16x64xf32> to vector<16x32xf32>
    %cst_55 = arith.constant 9.99999997E-7 : f32
    %144 = vector.broadcast %cst_55 : f32 to vector<16x32xf32>
    %145 = arith.addf %143, %144 : vector<16x32xf32>
    %146 = tpu.reciprocal %145 {approx = true} : vector<16x32xf32> -> vector<16x32xf32>
    %147 = arith.mulf %142, %146 : vector<16x32xf32>
    %148 = vector.extract_strided_slice %126 {offsets = [16, 0], sizes = [16, 32], strides = [1, 1]} : vector<32x32xf32> to vector<16x32xf32>
    %149 = vector.extract_strided_slice %134 {offsets = [16, 0], sizes = [16, 32], strides = [1, 1]} : vector<32x32xf32> to vector<16x32xf32>
    %150 = vector.extract_strided_slice %118 {offsets = [16, 0], sizes = [16, 32], strides = [1, 1]} : vector<32x32xf32> to vector<16x32xf32>
    %151 = tpu.concatenate %150, %2 in 1 : vector<16x32xf32>, vector<16x32xf32> -> vector<16x64xf32>
    %cst_56 = arith.constant dense<0.000000e+00> : vector<32x64xf32>
    %152 = tpu.matmul %149, %151, %cst_56 {dimension_numbers = #tpu.dot_dimension_numbers<[0], [0], [1], [1], [0, 1, 1, 1], [], []>} : vector<16x32xf32>, vector<16x64xf32>, vector<32x64xf32> -> vector<32x64xf32>
    %153 = arith.mulf %152, %1 : vector<32x64xf32>
    %cst_57 = arith.constant dense<0.000000e+00> : vector<16x64xf32>
    %154 = tpu.matmul %148, %153, %cst_57 {dimension_numbers = #tpu.dot_dimension_numbers<[1], [0], [0], [1], [0, 0, 1, 1], [], []>} : vector<16x32xf32>, vector<32x64xf32>, vector<16x64xf32> -> vector<16x64xf32>
    %155 = vector.extract_strided_slice %154 {offsets = [0, 0], sizes = [16, 32], strides = [1, 1]} : vector<16x64xf32> to vector<16x32xf32>
    %156 = vector.extract_strided_slice %154 {offsets = [0, 32], sizes = [16, 32], strides = [1, 1]} : vector<16x64xf32> to vector<16x32xf32>
    %cst_58 = arith.constant 9.99999997E-7 : f32
    %157 = vector.broadcast %cst_58 : f32 to vector<16x32xf32>
    %158 = arith.addf %156, %157 : vector<16x32xf32>
    %159 = tpu.reciprocal %158 {approx = true} : vector<16x32xf32> -> vector<16x32xf32>
    %160 = arith.mulf %155, %159 : vector<16x32xf32>
    %161 = tpu.concatenate %147, %160 in 0 : vector<16x32xf32>, vector<16x32xf32> -> vector<32x32xf32>
    %c0_59 = arith.constant 0 : index
    %c96_60 = arith.constant 96 : index
    %162 = vector.load %arg1[%c0_59, %c96_60] : memref<32x256xf32, #tpu.memory_space<vmem>>, vector<32x32xf32>
    %cst_61 = arith.constant dense<0.000000e+00> : vector<32x32xf32>
    %163 = tpu.matmul %161, %162, %cst_61 {dimension_numbers = #tpu.dot_dimension_numbers<[1], [0], [0], [1], [0, 0, 1, 1], [], []>} : vector<32x32xf32>, vector<32x32xf32>, vector<32x32xf32> -> vector<32x32xf32>
    %c0_62 = arith.constant 0 : index
    %c0_63 = arith.constant 0 : index
    %164 = vector.load %arg3[%c0_62, %c0_63] : memref<4x32xf32, #tpu.memory_space<vmem>>, vector<1x32xf32>
    %c1_64 = arith.constant 1 : index
    %c0_65 = arith.constant 0 : index
    %165 = vector.load %arg3[%c1_64, %c0_65] : memref<4x32xf32, #tpu.memory_space<vmem>>, vector<1x32xf32>
    %cst_66 = arith.constant dense<0.000000e+00> : vector<32xf32>
    %166 = vector.multi_reduction <add>, %163, %cst_66 [1] : vector<32x32xf32> to vector<32xf32>
    %167 = vector.shape_cast %166 : vector<32xf32> to vector<32x1xf32>
    %cst_67 = arith.constant 3.200000e+01 : f32
    %168 = vector.broadcast %cst_67 : f32 to vector<32x1xf32>
    %169 = arith.divf %167, %168 : vector<32x1xf32>
    %170 = vector.broadcast %169 : vector<32x1xf32> to vector<32x32xf32>
    %171 = arith.subf %163, %170 : vector<32x32xf32>
    %172 = arith.mulf %171, %171 : vector<32x32xf32>
    %cst_68 = arith.constant dense<0.000000e+00> : vector<32xf32>
    %173 = vector.multi_reduction <add>, %172, %cst_68 [1] : vector<32x32xf32> to vector<32xf32>
    %174 = vector.shape_cast %173 : vector<32xf32> to vector<32x1xf32>
    %cst_69 = arith.constant 3.200000e+01 : f32
    %175 = vector.broadcast %cst_69 : f32 to vector<32x1xf32>
    %176 = arith.divf %174, %175 : vector<32x1xf32>
    %177 = vector.broadcast %169 : vector<32x1xf32> to vector<32x32xf32>
    %178 = arith.subf %163, %177 : vector<32x32xf32>
    %cst_70 = arith.constant 9.99999974E-6 : f32
    %179 = vector.broadcast %cst_70 : f32 to vector<32x1xf32>
    %180 = arith.addf %176, %179 : vector<32x1xf32>
    %181 = math.rsqrt %180 : vector<32x1xf32>
    %182 = vector.broadcast %181 : vector<32x1xf32> to vector<32x32xf32>
    %183 = arith.mulf %178, %182 : vector<32x32xf32>
    %184 = vector.broadcast %164 : vector<1x32xf32> to vector<32x32xf32>
    %185 = arith.mulf %183, %184 : vector<32x32xf32>
    %186 = vector.broadcast %165 : vector<1x32xf32> to vector<32x32xf32>
    %187 = arith.addf %185, %186 : vector<32x32xf32>
    %c0_71 = arith.constant 0 : index
    %c128_72 = arith.constant 128 : index
    %188 = vector.load %arg1[%c0_71, %c128_72] : memref<32x256xf32, #tpu.memory_space<vmem>>, vector<32x64xf32>
    %cst_73 = arith.constant dense<0.000000e+00> : vector<32x64xf32>
    %189 = tpu.matmul %113, %188, %cst_73 {dimension_numbers = #tpu.dot_dimension_numbers<[1], [0], [0], [1], [0, 0, 1, 1], [], []>} : vector<32x32xf32>, vector<32x64xf32>, vector<32x64xf32> -> vector<32x64xf32>
    %c0_74 = arith.constant 0 : index
    %c192_75 = arith.constant 192 : index
    %190 = vector.load %arg1[%c0_74, %c192_75] : memref<32x256xf32, #tpu.memory_space<vmem>>, vector<32x64xf32>
    %cst_76 = arith.constant dense<0.000000e+00> : vector<32x64xf32>
    %191 = tpu.matmul %187, %190, %cst_76 {dimension_numbers = #tpu.dot_dimension_numbers<[1], [0], [0], [1], [0, 0, 1, 1], [], []>} : vector<32x32xf32>, vector<32x64xf32>, vector<32x64xf32> -> vector<32x64xf32>
    %192 = arith.addf %189, %191 : vector<32x64xf32>
    %cst_77 = arith.constant 0.000000e+00 : f32
    %193 = vector.broadcast %cst_77 : f32 to vector<32x64xf32>
    %194 = arith.cmpf ogt, %192, %193 : vector<32x64xf32>
    %cst_78 = arith.constant 1.000000e-01 : f32
    %195 = vector.broadcast %cst_78 : f32 to vector<32x64xf32>
    %196 = arith.mulf %195, %192 : vector<32x64xf32>
    %197 = arith.select %194, %192, %196 : vector<32x64xi1>, vector<32x64xf32>
    %c0_79 = arith.constant 0 : index
    %c0_80 = arith.constant 0 : index
    %198 = vector.load %arg2[%c0_79, %c0_80] : memref<64x32xf32, #tpu.memory_space<vmem>>, vector<64x32xf32>
    %cst_81 = arith.constant dense<0.000000e+00> : vector<32x32xf32>
    %199 = tpu.matmul %197, %198, %cst_81 {dimension_numbers = #tpu.dot_dimension_numbers<[1], [0], [0], [1], [0, 0, 1, 1], [], []>} : vector<32x64xf32>, vector<64x32xf32>, vector<32x32xf32> -> vector<32x32xf32>
    %c2_82 = arith.constant 2 : index
    %c0_83 = arith.constant 0 : index
    %200 = vector.load %arg3[%c2_82, %c0_83] : memref<4x32xf32, #tpu.memory_space<vmem>>, vector<1x32xf32>
    %c3_84 = arith.constant 3 : index
    %c0_85 = arith.constant 0 : index
    %201 = vector.load %arg3[%c3_84, %c0_85] : memref<4x32xf32, #tpu.memory_space<vmem>>, vector<1x32xf32>
    %cst_86 = arith.constant dense<0.000000e+00> : vector<32xf32>
    %202 = vector.multi_reduction <add>, %199, %cst_86 [1] : vector<32x32xf32> to vector<32xf32>
    %203 = vector.shape_cast %202 : vector<32xf32> to vector<32x1xf32>
    %cst_87 = arith.constant 3.200000e+01 : f32
    %204 = vector.broadcast %cst_87 : f32 to vector<32x1xf32>
    %205 = arith.divf %203, %204 : vector<32x1xf32>
    %206 = vector.broadcast %205 : vector<32x1xf32> to vector<32x32xf32>
    %207 = arith.subf %199, %206 : vector<32x32xf32>
    %208 = arith.mulf %207, %207 : vector<32x32xf32>
    %cst_88 = arith.constant dense<0.000000e+00> : vector<32xf32>
    %209 = vector.multi_reduction <add>, %208, %cst_88 [1] : vector<32x32xf32> to vector<32xf32>
    %210 = vector.shape_cast %209 : vector<32xf32> to vector<32x1xf32>
    %cst_89 = arith.constant 3.200000e+01 : f32
    %211 = vector.broadcast %cst_89 : f32 to vector<32x1xf32>
    %212 = arith.divf %210, %211 : vector<32x1xf32>
    %213 = vector.broadcast %205 : vector<32x1xf32> to vector<32x32xf32>
    %214 = arith.subf %199, %213 : vector<32x32xf32>
    %cst_90 = arith.constant 9.99999974E-6 : f32
    %215 = vector.broadcast %cst_90 : f32 to vector<32x1xf32>
    %216 = arith.addf %212, %215 : vector<32x1xf32>
    %217 = math.rsqrt %216 : vector<32x1xf32>
    %218 = vector.broadcast %217 : vector<32x1xf32> to vector<32x32xf32>
    %219 = arith.mulf %214, %218 : vector<32x32xf32>
    %220 = vector.broadcast %200 : vector<1x32xf32> to vector<32x32xf32>
    %221 = arith.mulf %219, %220 : vector<32x32xf32>
    %222 = vector.broadcast %201 : vector<1x32xf32> to vector<32x32xf32>
    %223 = arith.addf %221, %222 : vector<32x32xf32>
    %224 = arith.addf %113, %223 : vector<32x32xf32>
    %c0_91 = arith.constant 0 : index
    %c0_92 = arith.constant 0 : index
    %225 = vector.load %arg5[%c0_91, %c0_92] : memref<32x32xf32, #tpu.memory_space<vmem>>, vector<32x32xf32>
    tpu.vector_store %arg5[%c0_91, %c0_92], %224 {strides = array<i32>} : memref<32x32xf32, #tpu.memory_space<vmem>>, vector<32x32xf32>,
    return
  }
}

</mosaic_0001>

<llo_original>
// kernel: view_transformer_pallas.1
$region0: #{view_transformer_pallas.1}
  #allocation0 [shape = 'u32[]', space=smem, size = 0x4, offset = 0x4, fixed_abs, tag = 'smem constant byte address 0x4 - core index']
  #allocation1 [shape = 'u32[144,128]{1,0:T(1,128)}', space=vmem, size = 0x12000, scoped, tag = 'internal scratch']
  %s0 = inlined_call_operand.vmem [shape: f32[32,32], index: 0, kind: input, shape index: {}]
  %s1 = inlined_call_operand.vmem [shape: f32[32,256], index: 1, kind: input, shape index: {}]
  %s2 = inlined_call_operand.vmem [shape: f32[64,32], index: 2, kind: input, shape index: {}]
  %s3 = inlined_call_operand.vmem [shape: f32[4,32], index: 3, kind: input, shape index: {}]
  %s4 = inlined_call_operand.vmem [shape: f32[32,64], index: 4, kind: input, shape index: {}]
  %s5 = inlined_call_operand.hbm [shape: f32[32,32], index: 5, kind: output, shape index: {}]
  %s6 = sld [smem:[#allocation0]]
  $region30: #{view_transformer_pallas.1} parent=0
    _
  %s8 = ssub.s32 1, %s6
  %s9 = scalar_select 0, %s8, %s6
  $region1: #{view_transformer_pallas.1} parent=0
    #allocation2 [shape = 'u8[16384]{0}', space=vmem, size = 0x4000, scoped, tag = 'output window, operand 0, single buffered']
    #allocation3 [shape = 's32[1]{0}', space=sflag, size = 0x4, scoped, tag = 'scoped memory for view_transformer_pallas.1']
    %10 = vsyncpa [#allocation3], 0
    // Predicated region
    $region2: #{view_transformer_pallas.1} parent=1 // pred_check
      _
    $region3: #{view_transformer_pallas.1} parent=1 // pred_check_branch
      %12 = sbr.rel (0) target = $region5
    $region4: #{view_transformer_pallas.1} parent=1 // pred_region
      _
    $region5: #{view_transformer_pallas.1} parent=1 // pred_fallthru
      _
    // Predicated region
    $region6: #{view_transformer_pallas.1} parent=1 // pred_check
      _
    $region7: #{view_transformer_pallas.1} parent=1 // pred_check_branch
      %14 = sbr.rel (0) target = $region9
    $region8: #{view_transformer_pallas.1} parent=1 // pred_region
      _
    $region9: #{view_transformer_pallas.1} parent=1 // pred_fallthru
      _
    // Predicated region
    $region10: #{view_transformer_pallas.1} parent=1 // pred_check
      _
    $region11: #{view_transformer_pallas.1} parent=1 // pred_check_branch
      %16 = sbr.rel (0) target = $region13
    $region12: #{view_transformer_pallas.1} parent=1 // pred_region
      _
    $region13: #{view_transformer_pallas.1} parent=1 // pred_fallthru
      _
    // Predicated region
    $region14: #{view_transformer_pallas.1} parent=1 // pred_check
      _
    $region15: #{view_transformer_pallas.1} parent=1 // pred_check_branch
      %18 = sbr.rel (0) target = $region17
    $region16: #{view_transformer_pallas.1} parent=1 // pred_region
      _
    $region17: #{view_transformer_pallas.1} parent=1 // pred_fallthru
      _
    // Predicated region
    $region18: #{view_transformer_pallas.1} parent=1 // pred_check
      _
    $region19: #{view_transformer_pallas.1} parent=1 // pred_check_branch
      %20 = sbr.rel (0) target = $region21
    $region20: #{view_transformer_pallas.1} parent=1 // pred_region
      _
    $region21: #{view_transformer_pallas.1} parent=1 // pred_fallthru
      _
    %v21 = vld [vmem:[%s0] sm:$0xff]
    %v22 = vld [vmem:[%s0 + $0x8] sm:$0xff]
    %v23 = vld [vmem:[%s0 + $0x10] sm:$0xff]
    %v24 = vld [vmem:[%s0 + $0x18] sm:$0xff]
    %v25 = vld [vmem:[%s4] sm:$0xff]
    %v26 = vld [vmem:[%s4 + $0x8] sm:$0xff]
    %v27 = vld [vmem:[%s4 + $0x10] sm:$0xff]
    %v28 = vld [vmem:[%s4 + $0x18] sm:$0xff]
    %v29 = vld [vmem:[%s1] sm:$0xff]
    %v30 = vld [vmem:[%s1 + $0x10] sm:$0xff]
    %v31 = vld [vmem:[%s1 + $0x20] sm:$0xff]
    %v32 = vld [vmem:[%s1 + $0x30] sm:$0xff]
    %vm33 = vcmask 261120
    %v35 = vsel %vm33, %v21, 0
    %v38 = vsel %vm33, %v22, 0
    %v41 = vsel %vm33, %v23, 0
    %v44 = vsel %vm33, %v24, 0
    %46 = vmatprep.subr.mxu0 0.0
    %47 = vmatpush1.msra.mxu0 %v29
    %48 = vmatprep.subr.mxu0 0.0
    %49 = vmatpush1.msra.mxu0 %v30
    %50 = vmatprep.subr.mxu0 0.0
    %51 = vmatpush1.msra.mxu0 %v31
    %52 = vmatprep.subr.mxu0 0.0
    %53 = vmatpush1.msra.mxu0 %v32
    %54 = vmatprep.subr.mxu0 0.0
    %55 = vmatpush1.msra.mxu0 0.0
    %56 = vmatprep.subr.mxu0 0.0
    %57 = vmatpush1.msra.mxu0 0.0
    %58 = vmatprep.subr.mxu0 0.0
    %59 = vmatpush1.msra.mxu0 0.0
    %60 = vmatprep.subr.mxu0 0.0
    %61 = vmatpush1.msra.mxu0 0.0
    %62 = vmatprep.subr.mxu0 0.0
    %63 = vmatpush1.msra.mxu0 0.0
    %64 = vmatprep.subr.mxu0 0.0
    %65 = vmatpush1.msra.mxu0 0.0
    %66 = vmatprep.subr.mxu0 0.0
    %67 = vmatpush1.msra.mxu0 0.0
    %68 = vmatprep.subr.mxu0 0.0
    %69 = vmatpush1.msra.mxu0 0.0
    %70 = vmatprep.subr.mxu0 0.0
    %71 = vmatpush1.msra.mxu0 0.0
    %72 = vmatprep.subr.mxu0 0.0
    %73 = vmatpush1.msra.mxu0 0.0
    %74 = vmatprep.subr.mxu0 0.0
    %75 = vmatpush1.msra.mxu0 0.0
    %76 = vmatprep.subr.mxu0 0.0
    %77 = vmatpush1.msra.mxu0 0.0
    %78 = vmatprep.subr.mxu0 0.0
    %79 = vmatpush1.msra.mxu0 0.0
    %80 = vmatprep.subr.mxu0 0.0
    %81 = vmatpush1.msra.mxu0 0.0
    %82 = vmatprep.subr.mxu0 0.0
    %83 = vmatpush1.msra.mxu0 0.0
    %84 = vmatprep.subr.mxu0 0.0
    %85 = vmatpush1.msra.mxu0 0.0
    %86 = vmatprep.subr.mxu0 0.0
    %87 = vmatpush1.msra.mxu0 0.0
    %88 = vmatprep.subr.mxu0 0.0
    %89 = vmatpush1.msra.mxu0 0.0
    %90 = vmatprep.subr.mxu0 0.0
    %91 = vmatpush1.msra.mxu0 0.0
    %92 = vmatprep.subr.mxu0 0.0
    %93 = vmatpush1.msra.mxu0 0.0
    %94 = vmatprep.subr.mxu0 0.0
    %95 = vmatpush1.msra.mxu0 0.0
    %96 = vmatprep.subr.mxu0 0.0
    %97 = vmatpush1.msra.mxu0 0.0
    %98 = vmatprep.subr.mxu0 0.0
    %99 = vmatpush1.msra.mxu0 0.0
    %100 = vmatprep.subr.mxu0 0.0
    %101 = vmatpush1.msra.mxu0 0.0
    %102 = vmatprep.subr.mxu0 0.0
    %103 = vmatpush1.msra.mxu0 0.0
    %104 = vmatprep.subr.mxu0 0.0
    %105 = vmatpush1.msra.mxu0 0.0
    %106 = vmatprep.subr.mxu0 0.0
    %107 = vmatpush1.msra.mxu0 0.0
    %108 = vmatprep.subr.mxu0 0.0
    %109 = vmatpush1.msra.mxu0 0.0
    %110 = vmatprep.mubr.f32.mxu0 0.0
    %111 = vmatmul.mubr.f32.gmra.mrb[0].mxu0 %v35
    %v112 = vpop.f32.mrb[0].mxu0
    %v113 = vadd.f32 0.0, %v112
    %v114 = vpop.f32.mrb[0].mxu0
    %115 = vmatprep.mubr.f32.mxu0 0.0
    %116 = vmatmul.mubr.f32.gmra.mrb[0].mxu0 %v38
    %v117 = vpop.f32.mrb[0].mxu0
    %v118 = vadd.f32 0.0, %v117
    %v119 = vpop.f32.mrb[0].mxu0
    %120 = vmatprep.mubr.f32.mxu0 0.0
    %121 = vmatmul.mubr.f32.gmra.mrb[0].mxu0 %v41
    %v122 = vpop.f32.mrb[0].mxu0
    %v123 = vadd.f32 0.0, %v122
    %v124 = vpop.f32.mrb[0].mxu0
    %125 = vmatprep.mubr.f32.mxu0 0.0
    %126 = vmatmul.mubr.f32.gmra.mrb[0].mxu0 %v44
    %v127 = vpop.f32.mrb[0].mxu0
    %v128 = vadd.f32 0.0, %v127
    %v129 = vpop.f32.mrb[0].mxu0
    %130 = vdwg.mxu0
    %vm131 = vcmp.gt.f32.partialorder %v113, 0.0
    %vm132 = vcmp.gt.f32.partialorder %v118, 0.0
    %vm133 = vcmp.gt.f32.partialorder %v123, 0.0
    %vm134 = vcmp.gt.f32.partialorder %v128, 0.0
    %v135 = vadd.f32 %v113, 1.0
    %v136 = vadd.f32 %v118, 1.0
    %v137 = vadd.f32 %v123, 1.0
    %v138 = vadd.f32 %v128, 1.0
    %v139 = vmin.f32 %v113, 0.0
    %v140 = vmin.f32 %v118, 0.0
    %v141 = vmin.f32 %v123, 0.0
    %v142 = vmin.f32 %v128, 0.0
    %v143 = vmul.f32 %v139, 1.442695
    %v144 = vpow.pop %v143
    %v145 = vmul.f32 %v140, 1.442695
    %v146 = vpow.pop %v145
    %v147 = vmul.f32 %v141, 1.442695
    %v148 = vpow.pop %v147
    %v149 = vmul.f32 %v142, 1.442695
    %v150 = vpow.pop %v149
    %v151 = vsel %vm131, %v135, %v144
    %v152 = vsel %vm132, %v136, %v146
    %v153 = vsel %vm133, %v137, %v148
    %v154 = vsel %vm134, %v138, %v150
    %157 = vrot.lane.b32.xlu0 %v113, 64
    %v158 = vpop.permute.xlu0 %157
    %159 = vrot.lane.b32.xlu0 %v118, 64
    %v160 = vpop.permute.xlu0 %159
    %v163 = vsel %vm33, %v158, 1.0
    %v164 = vsel %vm33, %v160, 1.0
    %167 = vrot.lane.b32.xlu0 %v151, 96
    %v168 = vpop.permute.xlu0 %167
    %169 = vrot.lane.b32.xlu0 %v152, 96
    %v170 = vpop.permute.xlu0 %169
    %173 = vxpose.xlu0.b32.start [1/16] %v168, 128
    %174 = vxpose.xlu0.b32.cont [2/16] %v170, 128
    %175 = vxpose.xlu0.b32.cont [3/16] 0.0, 128
    %176 = vxpose.xlu0.b32.cont [4/16] 0.0, 128
    %177 = vxpose.xlu0.b32.cont [5/16] 0.0, 128
    %178 = vxpose.xlu0.b32.cont [6/16] 0.0, 128
    %179 = vxpose.xlu0.b32.cont [7/16] 0.0, 128
    %180 = vxpose.xlu0.b32.cont [8/16] 0.0, 128
    %181 = vxpose.xlu0.b32.cont [9/16] 0.0, 128
    %182 = vxpose.xlu0.b32.cont [10/16] 0.0, 128
    %183 = vxpose.xlu0.b32.cont [11/16] 0.0, 128
    %184 = vxpose.xlu0.b32.cont [12/16] 0.0, 128
    %185 = vxpose.xlu0.b32.cont [13/16] 0.0, 128
    %186 = vxpose.xlu0.b32.cont [14/16] 0.0, 128
    %187 = vxpose.xlu0.b32.cont [15/16] 0.0, 128
    %188 = vxpose.xlu0.b32.end [16/16] 0.0, 128
    %v189 = vpop.trf.xlu0
    %v190 = vpop.trf.xlu0
    %v191 = vpop.trf.xlu0
    %v192 = vpop.trf.xlu0
    %v193 = vpop.trf.xlu0
    %v194 = vpop.trf.xlu0
    %v195 = vpop.trf.xlu0
    %v196 = vpop.trf.xlu0
    %v197 = vpop.trf.xlu0
    %v198 = vpop.trf.xlu0
    %v199 = vpop.trf.xlu0
    %v200 = vpop.trf.xlu0
    %v201 = vpop.trf.xlu0
    %v202 = vpop.trf.xlu0
    %v203 = vpop.trf.xlu0
    %v204 = vpop.trf.xlu0
    %vm205 = vcmask 130048
    %v207 = vsel %vm205, %v189, 0
    %v210 = vsel %vm205, %v190, 0
    %v213 = vsel %vm205, %v191, 0
    %v216 = vsel %vm205, %v192, 0
    %218 = vmatprep.subr.mxu0 0.0
    %219 = vmatpush1.msra.mxu0 %v163
    %220 = vmatprep.subr.mxu0 0.0
    %221 = vmatpush1.msra.mxu0 %v164
    %222 = vmatprep.subr.mxu0 0.0
    %223 = vmatpush1.msra.mxu0 0.0
    %224 = vmatprep.subr.mxu0 0.0
    %225 = vmatpush1.msra.mxu0 0.0
    %226 = vmatprep.subr.mxu0 0.0
    %227 = vmatpush1.msra.mxu0 0.0
    %228 = vmatprep.subr.mxu0 0.0
    %229 = vmatpush1.msra.mxu0 0.0
    %230 = vmatprep.subr.mxu0 0.0
    %231 = vmatpush1.msra.mxu0 0.0
    %232 = vmatprep.subr.mxu0 0.0
    %233 = vmatpush1.msra.mxu0 0.0
    %234 = vmatprep.subr.mxu0 0.0
    %235 = vmatpush1.msra.mxu0 0.0
    %236 = vmatprep.subr.mxu0 0.0
    %237 = vmatpush1.msra.mxu0 0.0
    %238 = vmatprep.subr.mxu0 0.0
    %239 = vmatpush1.msra.mxu0 0.0
    %240 = vmatprep.subr.mxu0 0.0
    %241 = vmatpush1.msra.mxu0 0.0
    %242 = vmatprep.subr.mxu0 0.0
    %243 = vmatpush1.msra.mxu0 0.0
    %244 = vmatprep.subr.mxu0 0.0
    %245 = vmatpush1.msra.mxu0 0.0
    %246 = vmatprep.subr.mxu0 0.0
    %247 = vmatpush1.msra.mxu0 0.0
    %248 = vmatprep.subr.mxu0 0.0
    %249 = vmatpush1.msra.mxu0 0.0
    %250 = vmatprep.subr.mxu0 0.0
    %251 = vmatpush1.msra.mxu0 0.0
    %252 = vmatprep.subr.mxu0 0.0
    %253 = vmatpush1.msra.mxu0 0.0
    %254 = vmatprep.subr.mxu0 0.0
    %255 = vmatpush1.msra.mxu0 0.0
    %256 = vmatprep.subr.mxu0 0.0
    %257 = vmatpush1.msra.mxu0 0.0
    %258 = vmatprep.subr.mxu0 0.0
    %259 = vmatpush1.msra.mxu0 0.0
    %260 = vmatprep.subr.mxu0 0.0
    %261 = vmatpush1.msra.mxu0 0.0
    %262 = vmatprep.subr.mxu0 0.0
    %263 = vmatpush1.msra.mxu0 0.0
    %264 = vmatprep.subr.mxu0 0.0
    %265 = vmatpush1.msra.mxu0 0.0
    %266 = vmatprep.subr.mxu0 0.0
    %267 = vmatpush1.msra.mxu0 0.0
    %268 = vmatprep.subr.mxu0 0.0
    %269 = vmatpush1.msra.mxu0 0.0
    %270 = vmatprep.subr.mxu0 0.0
    %271 = vmatpush1.msra.mxu0 0.0
    %272 = vmatprep.subr.mxu0 0.0
    %273 = vmatpush1.msra.mxu0 0.0
    %274 = vmatprep.subr.mxu0 0.0
    %275 = vmatpush1.msra.mxu0 0.0
    %276 = vmatprep.subr.mxu0 0.0
    %277 = vmatpush1.msra.mxu0 0.0
    %278 = vmatprep.subr.mxu0 0.0
    %279 = vmatpush1.msra.mxu0 0.0
    %280 = vmatprep.subr.mxu0 0.0
    %281 = vmatpush1.msra.mxu0 0.0
    %282 = vmatprep.mubr.f32.mxu0 0.0
    %283 = vmatmul.mubr.f32.gmra.mrb[0].mxu0 %v207
    %v284 = vpop.f32.mrb[0].mxu0
    %v285 = vadd.f32 0.0, %v284
    %v286 = vpop.f32.mrb[0].mxu0
    %287 = vmatprep.mubr.f32.mxu0 0.0
    %288 = vmatmul.mubr.f32.gmra.mrb[0].mxu0 %v210
    %v289 = vpop.f32.mrb[0].mxu0
    %v290 = vadd.f32 0.0, %v289
    %v291 = vpop.f32.mrb[0].mxu0
    %292 = vmatprep.mubr.f32.mxu0 0.0
    %293 = vmatmul.mubr.f32.gmra.mrb[0].mxu0 %v213
    %v294 = vpop.f32.mrb[0].mxu0
    %v295 = vadd.f32 0.0, %v294
    %v296 = vpop.f32.mrb[0].mxu0
    %297 = vmatprep.mubr.f32.mxu0 0.0
    %298 = vmatmul.mubr.f32.gmra.mrb[0].mxu0 %v216
    %v299 = vpop.f32.mrb[0].mxu0
    %v300 = vadd.f32 0.0, %v299
    %v301 = vpop.f32.mrb[0].mxu0
    %302 = vdwg.mxu0
    %v303 = vmul.f32 %v285, %v25
    %v304 = vmul.f32 %v290, %v26
    %v305 = vmul.f32 %v295, %v27
    %v306 = vmul.f32 %v300, %v28
    %v307 = vsel %vm33, %v151, 0
    %v309 = vsel %vm33, %v152, 0
    %311 = vmatprep.subr.mxu0 0.0
    %312 = vmatpush1.msra.mxu0 %v303
    %313 = vmatprep.subr.mxu0 0.0
    %314 = vmatpush1.msra.mxu0 %v304
    %315 = vmatprep.subr.mxu0 0.0
    %316 = vmatpush1.msra.mxu0 %v305
    %317 = vmatprep.subr.mxu0 0.0
    %318 = vmatpush1.msra.mxu0 %v306
    %319 = vmatprep.subr.mxu0 0.0
    %320 = vmatpush1.msra.mxu0 0.0
    %321 = vmatprep.subr.mxu0 0.0
    %322 = vmatpush1.msra.mxu0 0.0
    %323 = vmatprep.subr.mxu0 0.0
    %324 = vmatpush1.msra.mxu0 0.0
    %325 = vmatprep.subr.mxu0 0.0
    %326 = vmatpush1.msra.mxu0 0.0
    %327 = vmatprep.subr.mxu0 0.0
    %328 = vmatpush1.msra.mxu0 0.0
    %329 = vmatprep.subr.mxu0 0.0
    %330 = vmatpush1.msra.mxu0 0.0
    %331 = vmatprep.subr.mxu0 0.0
    %332 = vmatpush1.msra.mxu0 0.0
    %333 = vmatprep.subr.mxu0 0.0
    %334 = vmatpush1.msra.mxu0 0.0
    %335 = vmatprep.subr.mxu0 0.0
    %336 = vmatpush1.msra.mxu0 0.0
    %337 = vmatprep.subr.mxu0 0.0
    %338 = vmatpush1.msra.mxu0 0.0
    %339 = vmatprep.subr.mxu0 0.0
    %340 = vmatpush1.msra.mxu0 0.0
    %341 = vmatprep.subr.mxu0 0.0
    %342 = vmatpush1.msra.mxu0 0.0
    %343 = vmatprep.subr.mxu0 0.0
    %344 = vmatpush1.msra.mxu0 0.0
    %345 = vmatprep.subr.mxu0 0.0
    %346 = vmatpush1.msra.mxu0 0.0
    %347 = vmatprep.subr.mxu0 0.0
    %348 = vmatpush1.msra.mxu0 0.0
    %349 = vmatprep.subr.mxu0 0.0
    %350 = vmatpush1.msra.mxu0 0.0
    %351 = vmatprep.subr.mxu0 0.0
    %352 = vmatpush1.msra.mxu0 0.0
    %353 = vmatprep.subr.mxu0 0.0
    %354 = vmatpush1.msra.mxu0 0.0
    %355 = vmatprep.subr.mxu0 0.0
    %356 = vmatpush1.msra.mxu0 0.0
    %357 = vmatprep.subr.mxu0 0.0
    %358 = vmatpush1.msra.mxu0 0.0
    %359 = vmatprep.subr.mxu0 0.0
    %360 = vmatpush1.msra.mxu0 0.0
    %361 = vmatprep.subr.mxu0 0.0
    %362 = vmatpush1.msra.mxu0 0.0
    %363 = vmatprep.subr.mxu0 0.0
    %364 = vmatpush1.msra.mxu0 0.0
    %365 = vmatprep.subr.mxu0 0.0
    %366 = vmatpush1.msra.mxu0 0.0
    %367 = vmatprep.subr.mxu0 0.0
    %368 = vmatpush1.msra.mxu0 0.0
    %369 = vmatprep.subr.mxu0 0.0
    %370 = vmatpush1.msra.mxu0 0.0
    %371 = vmatprep.subr.mxu0 0.0
    %372 = vmatpush1.msra.mxu0 0.0
    %373 = vmatprep.subr.mxu0 0.0
    %374 = vmatpush1.msra.mxu0 0.0
    %375 = vmatprep.mubr.f32.mxu0 0.0
    %376 = vmatmul.mubr.f32.gmra.mrb[0].mxu0 %v307
    %v377 = vpop.f32.mrb[0].mxu0
    %v378 = vadd.f32 0.0, %v377
    %v379 = vpop.f32.mrb[0].mxu0
    %380 = vmatprep.mubr.f32.mxu0 0.0
    %381 = vmatmul.mubr.f32.gmra.mrb[0].mxu0 %v309
    %v382 = vpop.f32.mrb[0].mxu0
    %v383 = vadd.f32 0.0, %v382
    %v384 = vpop.f32.mrb[0].mxu0
    %385 = vdwg.mxu0
    %v386 = vadd.f32 %v378, 1e-06
    %v387 = vadd.f32 %v383, 1e-06
    %v388 = vrcp.pop %v386
    %v389 = vrcp.pop %v387
    %392 = vrot.lane.b32.xlu0 %v388, 96
    %v393 = vpop.permute.xlu0 %392
    %394 = vrot.lane.b32.xlu0 %v389, 96
    %v395 = vpop.permute.xlu0 %394
    %v398 = vmul.f32 %v378, %v393
    %v399 = vmul.f32 %v383, %v395
    %402 = vrot.lane.b32.xlu0 %v123, 64
    %v403 = vpop.permute.xlu0 %402
    %404 = vrot.lane.b32.xlu0 %v128, 64
    %v405 = vpop.permute.xlu0 %404
    %v408 = vsel %vm33, %v403, 1.0
    %v409 = vsel %vm33, %v405, 1.0
    %412 = vrot.lane.b32.xlu0 %v153, 96
    %v413 = vpop.permute.xlu0 %412
    %414 = vrot.lane.b32.xlu0 %v154, 96
    %v415 = vpop.permute.xlu0 %414
    %418 = vxpose.xlu0.b32.start [1/16] %v413, 128
    %419 = vxpose.xlu0.b32.cont [2/16] %v415, 128
    %420 = vxpose.xlu0.b32.cont [3/16] 0.0, 128
    %421 = vxpose.xlu0.b32.cont [4/16] 0.0, 128
    %422 = vxpose.xlu0.b32.cont [5/16] 0.0, 128
    %423 = vxpose.xlu0.b32.cont [6/16] 0.0, 128
    %424 = vxpose.xlu0.b32.cont [7/16] 0.0, 128
    %425 = vxpose.xlu0.b32.cont [8/16] 0.0, 128
    %426 = vxpose.xlu0.b32.cont [9/16] 0.0, 128
    %427 = vxpose.xlu0.b32.cont [10/16] 0.0, 128
    %428 = vxpose.xlu0.b32.cont [11/16] 0.0, 128
    %429 = vxpose.xlu0.b32.cont [12/16] 0.0, 128
    %430 = vxpose.xlu0.b32.cont [13/16] 0.0, 128
    %431 = vxpose.xlu0.b32.cont [14/16] 0.0, 128
    %432 = vxpose.xlu0.b32.cont [15/16] 0.0, 128
    %433 = vxpose.xlu0.b32.end [16/16] 0.0, 128
    %v434 = vpop.trf.xlu0
    %v435 = vpop.trf.xlu0
    %v436 = vpop.trf.xlu0
    %v437 = vpop.trf.xlu0
    %v438 = vpop.trf.xlu0
    %v439 = vpop.trf.xlu0
    %v440 = vpop.trf.xlu0
    %v441 = vpop.trf.xlu0
    %v442 = vpop.trf.xlu0
    %v443 = vpop.trf.xlu0
    %v444 = vpop.trf.xlu0
    %v445 = vpop.trf.xlu0
    %v446 = vpop.trf.xlu0
    %v447 = vpop.trf.xlu0
    %v448 = vpop.trf.xlu0
    %v449 = vpop.trf.xlu0
    %v451 = vsel %vm205, %v434, 0
    %v454 = vsel %vm205, %v435, 0
    %v457 = vsel %vm205, %v436, 0
    %v460 = vsel %vm205, %v437, 0
    %462 = vmatprep.subr.mxu0 0.0
    %463 = vmatpush1.msra.mxu0 %v408
    %464 = vmatprep.subr.mxu0 0.0
    %465 = vmatpush1.msra.mxu0 %v409
    %466 = vmatprep.subr.mxu0 0.0
    %467 = vmatpush1.msra.mxu0 0.0
    %468 = vmatprep.subr.mxu0 0.0
    %469 = vmatpush1.msra.mxu0 0.0
    %470 = vmatprep.subr.mxu0 0.0
    %471 = vmatpush1.msra.mxu0 0.0
    %472 = vmatprep.subr.mxu0 0.0
    %473 = vmatpush1.msra.mxu0 0.0
    %474 = vmatprep.subr.mxu0 0.0
    %475 = vmatpush1.msra.mxu0 0.0
    %476 = vmatprep.subr.mxu0 0.0
    %477 = vmatpush1.msra.mxu0 0.0
    %478 = vmatprep.subr.mxu0 0.0
    %479 = vmatpush1.msra.mxu0 0.0
    %480 = vmatprep.subr.mxu0 0.0
    %481 = vmatpush1.msra.mxu0 0.0
    %482 = vmatprep.subr.mxu0 0.0
    %483 = vmatpush1.msra.mxu0 0.0
    %484 = vmatprep.subr.mxu0 0.0
    %485 = vmatpush1.msra.mxu0 0.0
    %486 = vmatprep.subr.mxu0 0.0
    %487 = vmatpush1.msra.mxu0 0.0
    %488 = vmatprep.subr.mxu0 0.0
    %489 = vmatpush1.msra.mxu0 0.0
    %490 = vmatprep.subr.mxu0 0.0
    %491 = vmatpush1.msra.mxu0 0.0
    %492 = vmatprep.subr.mxu0 0.0
    %493 = vmatpush1.msra.mxu0 0.0
    %494 = vmatprep.subr.mxu0 0.0
    %495 = vmatpush1.msra.mxu0 0.0
    %496 = vmatprep.subr.mxu0 0.0
    %497 = vmatpush1.msra.mxu0 0.0
    %498 = vmatprep.subr.mxu0 0.0
    %499 = vmatpush1.msra.mxu0 0.0
    %500 = vmatprep.subr.mxu0 0.0
    %501 = vmatpush1.msra.mxu0 0.0
    %502 = vmatprep.subr.mxu0 0.0
    %503 = vmatpush1.msra.mxu0 0.0
    %504 = vmatprep.subr.mxu0 0.0
    %505 = vmatpush1.msra.mxu0 0.0
    %506 = vmatprep.subr.mxu0 0.0
    %507 = vmatpush1.msra.mxu0 0.0
    %508 = vmatprep.subr.mxu0 0.0
    %509 = vmatpush1.msra.mxu0 0.0
    %510 = vmatprep.subr.mxu0 0.0
    %511 = vmatpush1.msra.mxu0 0.0
    %512 = vmatprep.subr.mxu0 0.0
    %513 = vmatpush1.msra.mxu0 0.0
    %514 = vmatprep.subr.mxu0 0.0
    %515 = vmatpush1.msra.mxu0 0.0
    %516 = vmatprep.subr.mxu0 0.0
    %517 = vmatpush1.msra.mxu0 0.0
    %518 = vmatprep.subr.mxu0 0.0
    %519 = vmatpush1.msra.mxu0 0.0
    %520 = vmatprep.subr.mxu0 0.0
    %521 = vmatpush1.msra.mxu0 0.0
    %522 = vmatprep.subr.mxu0 0.0
    %523 = vmatpush1.msra.mxu0 0.0
    %524 = vmatprep.subr.mxu0 0.0
    %525 = vmatpush1.msra.mxu0 0.0
    %526 = vmatprep.mubr.f32.mxu0 0.0
    %527 = vmatmul.mubr.f32.gmra.mrb[0].mxu0 %v451
    %v528 = vpop.f32.mrb[0].mxu0
    %v529 = vadd.f32 0.0, %v528
    %v530 = vpop.f32.mrb[0].mxu0
    %531 = vmatprep.mubr.f32.mxu0 0.0
    %532 = vmatmul.mubr.f32.gmra.mrb[0].mxu0 %v454
    %v533 = vpop.f32.mrb[0].mxu0
    %v534 = vadd.f32 0.0, %v533
    %v535 = vpop.f32.mrb[0].mxu0
    %536 = vmatprep.mubr.f32.mxu0 0.0
    %537 = vmatmul.mubr.f32.gmra.mrb[0].mxu0 %v457
    %v538 = vpop.f32.mrb[0].mxu0
    %v539 = vadd.f32 0.0, %v538
    %v540 = vpop.f32.mrb[0].mxu0
    %541 = vmatprep.mubr.f32.mxu0 0.0
    %542 = vmatmul.mubr.f32.gmra.mrb[0].mxu0 %v460
    %v543 = vpop.f32.mrb[0].mxu0
    %v544 = vadd.f32 0.0, %v543
    %v545 = vpop.f32.mrb[0].mxu0
    %546 = vdwg.mxu0
    %v547 = vmul.f32 %v529, %v25
    %v548 = vmul.f32 %v534, %v26
    %v549 = vmul.f32 %v539, %v27
    %v550 = vmul.f32 %v544, %v28
    %v551 = vsel %vm33, %v153, 0
    %v553 = vsel %vm33, %v154, 0
    %555 = vmatprep.subr.mxu0 0.0
    %556 = vmatpush1.msra.mxu0 %v547
    %557 = vmatprep.subr.mxu0 0.0
    %558 = vmatpush1.msra.mxu0 %v548
    %559 = vmatprep.subr.mxu0 0.0
    %560 = vmatpush1.msra.mxu0 %v549
    %561 = vmatprep.subr.mxu0 0.0
    %562 = vmatpush1.msra.mxu0 %v550
    %563 = vmatprep.subr.mxu0 0.0
    %564 = vmatpush1.msra.mxu0 0.0
    %565 = vmatprep.subr.mxu0 0.0
    %566 = vmatpush1.msra.mxu0 0.0
    %567 = vmatprep.subr.mxu0 0.0
    %568 = vmatpush1.msra.mxu0 0.0
    %569 = vmatprep.subr.mxu0 0.0
    %570 = vmatpush1.msra.mxu0 0.0
    %571 = vmatprep.subr.mxu0 0.0
    %572 = vmatpush1.msra.mxu0 0.0
    %573 = vmatprep.subr.mxu0 0.0
    %574 = vmatpush1.msra.mxu0 0.0
    %575 = vmatprep.subr.mxu0 0.0
    %576 = vmatpush1.msra.mxu0 0.0
    %577 = vmatprep.subr.mxu0 0.0
    %578 = vmatpush1.msra.mxu0 0.0
    %579 = vmatprep.subr.mxu0 0.0
    %580 = vmatpush1.msra.mxu0 0.0
    %581 = vmatprep.subr.mxu0 0.0
    %582 = vmatpush1.msra.mxu0 0.0
    %583 = vmatprep.subr.mxu0 0.0
    %584 = vmatpush1.msra.mxu0 0.0
    %585 = vmatprep.subr.mxu0 0.0
    %586 = vmatpush1.msra.mxu0 0.0
    %587 = vmatprep.subr.mxu0 0.0
    %588 = vmatpush1.msra.mxu0 0.0
    %589 = vmatprep.subr.mxu0 0.0
    %590 = vmatpush1.msra.mxu0 0.0
    %591 = vmatprep.subr.mxu0 0.0
    %592 = vmatpush1.msra.mxu0 0.0
    %593 = vmatprep.subr.mxu0 0.0
    %594 = vmatpush1.msra.mxu0 0.0
    %595 = vmatprep.subr.mxu0 0.0
    %596 = vmatpush1.msra.mxu0 0.0
    %597 = vmatprep.subr.mxu0 0.0
    %598 = vmatpush1.msra.mxu0 0.0
    %599 = vmatprep.subr.mxu0 0.0
    %600 = vmatpush1.msra.mxu0 0.0
    %601 = vmatprep.subr.mxu0 0.0
    %602 = vmatpush1.msra.mxu0 0.0
    %603 = vmatprep.subr.mxu0 0.0
    %604 = vmatpush1.msra.mxu0 0.0
    %605 = vmatprep.subr.mxu0 0.0
    %606 = vmatpush1.msra.mxu0 0.0
    %607 = vmatprep.subr.mxu0 0.0
    %608 = vmatpush1.msra.mxu0 0.0
    %609 = vmatprep.subr.mxu0 0.0
    %610 = vmatpush1.msra.mxu0 0.0
    %611 = vmatprep.subr.mxu0 0.0
    %612 = vmatpush1.msra.mxu0 0.0
    %613 = vmatprep.subr.mxu0 0.0
    %614 = vmatpush1.msra.mxu0 0.0
    %615 = vmatprep.subr.mxu0 0.0
    %616 = vmatpush1.msra.mxu0 0.0
    %617 = vmatprep.subr.mxu0 0.0
    %618 = vmatpush1.msra.mxu0 0.0
    %619 = vmatprep.mubr.f32.mxu0 0.0
    %620 = vmatmul.mubr.f32.gmra.mrb[0].mxu0 %v551
    %v621 = vpop.f32.mrb[0].mxu0
    %v622 = vadd.f32 0.0, %v621
    %v623 = vpop.f32.mrb[0].mxu0
    %624 = vmatprep.mubr.f32.mxu0 0.0
    %625 = vmatmul.mubr.f32.gmra.mrb[0].mxu0 %v553
    %v626 = vpop.f32.mrb[0].mxu0
    %v627 = vadd.f32 0.0, %v626
    %v628 = vpop.f32.mrb[0].mxu0
    %629 = vdwg.mxu0
    %v630 = vadd.f32 %v622, 1e-06
    %v631 = vadd.f32 %v627, 1e-06
    %v632 = vrcp.pop %v630
    %v633 = vrcp.pop %v631
    %636 = vrot.lane.b32.xlu0 %v632, 96
    %v637 = vpop.permute.xlu0 %636
    %638 = vrot.lane.b32.xlu0 %v633, 96
    %v639 = vpop.permute.xlu0 %638
    %v642 = vmul.f32 %v622, %v637
    %v643 = vmul.f32 %v627, %v639
    %648 = vrot.lane.b32.xlu0 %v29, 32
    %v649 = vpop.permute.xlu0 %648
    %650 = vrot.lane.b32.xlu0 %v30, 32
    %v651 = vpop.permute.xlu0 %650
    %652 = vrot.lane.b32.xlu0 %v31, 32
    %v653 = vpop.permute.xlu0 %652
    %654 = vrot.lane.b32.xlu0 %v32, 32
    %v655 = vpop.permute.xlu0 %654
    %v661 = vsel %vm33, %v398, 0
    %v664 = vsel %vm33, %v399, 0
    %v667 = vsel %vm33, %v642, 0
    %v670 = vsel %vm33, %v643, 0
    %672 = vmatprep.subr.mxu0 0.0
    %673 = vmatpush1.msra.mxu0 %v649
    %674 = vmatprep.subr.mxu0 0.0
    %675 = vmatpush1.msra.mxu0 %v651
    %676 = vmatprep.subr.mxu0 0.0
    %677 = vmatpush1.msra.mxu0 %v653
    %678 = vmatprep.subr.mxu0 0.0
    %679 = vmatpush1.msra.mxu0 %v655
    %680 = vmatprep.subr.mxu0 0.0
    %681 = vmatpush1.msra.mxu0 0.0
    %682 = vmatprep.subr.mxu0 0.0
    %683 = vmatpush1.msra.mxu0 0.0
    %684 = vmatprep.subr.mxu0 0.0
    %685 = vmatpush1.msra.mxu0 0.0
    %686 = vmatprep.subr.mxu0 0.0
    %687 = vmatpush1.msra.mxu0 0.0
    %688 = vmatprep.subr.mxu0 0.0
    %689 = vmatpush1.msra.mxu0 0.0
    %690 = vmatprep.subr.mxu0 0.0
    %691 = vmatpush1.msra.mxu0 0.0
    %692 = vmatprep.subr.mxu0 0.0
    %693 = vmatpush1.msra.mxu0 0.0
    %694 = vmatprep.subr.mxu0 0.0
    %695 = vmatpush1.msra.mxu0 0.0
    %696 = vmatprep.subr.mxu0 0.0
    %697 = vmatpush1.msra.mxu0 0.0
    %698 = vmatprep.subr.mxu0 0.0
    %699 = vmatpush1.msra.mxu0 0.0
    %700 = vmatprep.subr.mxu0 0.0
    %701 = vmatpush1.msra.mxu0 0.0
    %702 = vmatprep.subr.mxu0 0.0
    %703 = vmatpush1.msra.mxu0 0.0
    %704 = vmatprep.subr.mxu0 0.0
    %705 = vmatpush1.msra.mxu0 0.0
    %706 = vmatprep.subr.mxu0 0.0
    %707 = vmatpush1.msra.mxu0 0.0
    %708 = vmatprep.subr.mxu0 0.0
    %709 = vmatpush1.msra.mxu0 0.0
    %710 = vmatprep.subr.mxu0 0.0
    %711 = vmatpush1.msra.mxu0 0.0
    %712 = vmatprep.subr.mxu0 0.0
    %713 = vmatpush1.msra.mxu0 0.0
    %714 = vmatprep.subr.mxu0 0.0
    %715 = vmatpush1.msra.mxu0 0.0
    %716 = vmatprep.subr.mxu0 0.0
    %717 = vmatpush1.msra.mxu0 0.0
    %718 = vmatprep.subr.mxu0 0.0
    %719 = vmatpush1.msra.mxu0 0.0
    %720 = vmatprep.subr.mxu0 0.0
    %721 = vmatpush1.msra.mxu0 0.0
    %722 = vmatprep.subr.mxu0 0.0
    %723 = vmatpush1.msra.mxu0 0.0
    %724 = vmatprep.subr.mxu0 0.0
    %725 = vmatpush1.msra.mxu0 0.0
    %726 = vmatprep.subr.mxu0 0.0
    %727 = vmatpush1.msra.mxu0 0.0
    %728 = vmatprep.subr.mxu0 0.0
    %729 = vmatpush1.msra.mxu0 0.0
    %730 = vmatprep.subr.mxu0 0.0
    %731 = vmatpush1.msra.mxu0 0.0
    %732 = vmatprep.subr.mxu0 0.0
    %733 = vmatpush1.msra.mxu0 0.0
    %734 = vmatprep.subr.mxu0 0.0
    %735 = vmatpush1.msra.mxu0 0.0
    %736 = vmatprep.mubr.f32.mxu0 0.0
    %737 = vmatmul.mubr.f32.gmra.mrb[0].mxu0 %v661
    %v738 = vpop.f32.mrb[0].mxu0
    %v739 = vadd.f32 0.0, %v738
    %v740 = vpop.f32.mrb[0].mxu0
    %741 = vmatprep.mubr.f32.mxu0 0.0
    %742 = vmatmul.mubr.f32.gmra.mrb[0].mxu0 %v664
    %v743 = vpop.f32.mrb[0].mxu0
    %v744 = vadd.f32 0.0, %v743
    %v745 = vpop.f32.mrb[0].mxu0
    %746 = vmatprep.mubr.f32.mxu0 0.0
    %747 = vmatmul.mubr.f32.gmra.mrb[0].mxu0 %v667
    %v748 = vpop.f32.mrb[0].mxu0
    %v749 = vadd.f32 0.0, %v748
    %v750 = vpop.f32.mrb[0].mxu0
    %751 = vmatprep.mubr.f32.mxu0 0.0
    %752 = vmatmul.mubr.f32.gmra.mrb[0].mxu0 %v670
    %v753 = vpop.f32.mrb[0].mxu0
    %v754 = vadd.f32 0.0, %v753
    %v755 = vpop.f32.mrb[0].mxu0
    %756 = vdwg.mxu0
    %v757 = vld [vmem:[%s3] sm:$0x1]
    %v758 = vld [vmem:[%s3 + $0x1] sm:$0x1]
    %v759 = vsel %vm33, %v739, 0.0
    %760 = vadd.xlane.f32.xlu0 %v759
    %v761 = vpop.xlane.xlu0 %760
    %v762 = vsel %vm33, %v744, 0.0
    %763 = vadd.xlane.f32.xlu0 %v762
    %v764 = vpop.xlane.xlu0 %763
    %v765 = vsel %vm33, %v749, 0.0
    %766 = vadd.xlane.f32.xlu0 %v765
    %v767 = vpop.xlane.xlu0 %766
    %v768 = vsel %vm33, %v754, 0.0
    %769 = vadd.xlane.f32.xlu0 %v768
    %v770 = vpop.xlane.xlu0 %769
    %v771 = vrcp.pop 32.0
    %v772 = vmul.f32 %v761, %v771
    %v773 = vmul.f32 %v764, %v771
    %v774 = vmul.f32 %v767, %v771
    %v775 = vmul.f32 %v770, %v771
    %v776 = vsub.f32 %v739, %v772
    %v777 = vsub.f32 %v744, %v773
    %v778 = vsub.f32 %v749, %v774
    %v779 = vsub.f32 %v754, %v775
    %v780 = vmul.f32 %v776, %v776
    %v781 = vmul.f32 %v777, %v777
    %v782 = vmul.f32 %v778, %v778
    %v783 = vmul.f32 %v779, %v779
    %v784 = vsel %vm33, %v780, 0.0
    %785 = vadd.xlane.f32.xlu0 %v784
    %v786 = vpop.xlane.xlu0 %785
    %v787 = vsel %vm33, %v781, 0.0
    %788 = vadd.xlane.f32.xlu0 %v787
    %v789 = vpop.xlane.xlu0 %788
    %v790 = vsel %vm33, %v782, 0.0
    %791 = vadd.xlane.f32.xlu0 %v790
    %v792 = vpop.xlane.xlu0 %791
    %v793 = vsel %vm33, %v783, 0.0
    %794 = vadd.xlane.f32.xlu0 %v793
    %v795 = vpop.xlane.xlu0 %794
    %v796 = vmul.f32 %v786, %v771
    %v797 = vmul.f32 %v789, %v771
    %v798 = vmul.f32 %v792, %v771
    %v799 = vmul.f32 %v795, %v771
    %v800 = vadd.f32 %v796, 1e-05
    %v801 = vadd.f32 %v797, 1e-05
    %v802 = vadd.f32 %v798, 1e-05
    %v803 = vadd.f32 %v799, 1e-05
    %v804 = vrsqrt.pop %v800
    %v805 = vrsqrt.pop %v801
    %v806 = vrsqrt.pop %v802
    %v807 = vrsqrt.pop %v803
    %v808 = vmul.f32 %v776, %v804
    %v809 = vmul.f32 %v777, %v805
    %v810 = vmul.f32 %v778, %v806
    %v811 = vmul.f32 %v779, %v807
    %v812 = vlaneseq
    %v813 = vshrl.u32 %v812, 7
    %v814 = vsub.s32 0, %v813
    %v815 = vrot.slane %v757, %v814
    %v816 = vmul.f32 %v808, %v815
    %v817 = vmul.f32 %v809, %v815
    %v818 = vmul.f32 %v810, %v815
    %v819 = vmul.f32 %v811, %v815
    %v820 = vlaneseq
    %v821 = vshrl.u32 %v820, 7
    %v822 = vsub.s32 0, %v821
    %v823 = vrot.slane %v758, %v822
    %v824 = vadd.f32 %v816, %v823
    %v825 = vadd.f32 %v817, %v823
    %v826 = vadd.f32 %v818, %v823
    %v827 = vadd.f32 %v819, %v823
    %v828 = vld [vmem:[%s1 + $0x8] sm:$0xff]
    %v829 = vld [vmem:[%s1 + $0x18] sm:$0xff]
    %v830 = vld [vmem:[%s1 + $0x28] sm:$0xff]
    %v831 = vld [vmem:[%s1 + $0x38] sm:$0xff]
    %836 = vrot.lane.b32.xlu0 %v828, 64
    %v837 = vpop.permute.xlu0 %836
    %838 = vrot.lane.b32.xlu0 %v829, 64
    %v839 = vpop.permute.xlu0 %838
    %840 = vrot.lane.b32.xlu0 %v830, 64
    %v841 = vpop.permute.xlu0 %840
    %842 = vrot.lane.b32.xlu0 %v831, 64
    %v843 = vpop.permute.xlu0 %842
    %v849 = vsel %vm33, %v824, 0
    %v852 = vsel %vm33, %v825, 0
    %v855 = vsel %vm33, %v826, 0
    %v858 = vsel %vm33, %v827, 0
    %860 = vmatprep.subr.mxu0 0.0
    %861 = vmatpush1.msra.mxu0 %v837
    %862 = vmatprep.subr.mxu0 0.0
    %863 = vmatpush1.msra.mxu0 %v839
    %864 = vmatprep.subr.mxu0 0.0
    %865 = vmatpush1.msra.mxu0 %v841
    %866 = vmatprep.subr.mxu0 0.0
    %867 = vmatpush1.msra.mxu0 %v843
    %868 = vmatprep.subr.mxu0 0.0
    %869 = vmatpush1.msra.mxu0 0.0
    %870 = vmatprep.subr.mxu0 0.0
    %871 = vmatpush1.msra.mxu0 0.0
    %872 = vmatprep.subr.mxu0 0.0
    %873 = vmatpush1.msra.mxu0 0.0
    %874 = vmatprep.subr.mxu0 0.0
    %875 = vmatpush1.msra.mxu0 0.0
    %876 = vmatprep.subr.mxu0 0.0
    %877 = vmatpush1.msra.mxu0 0.0
    %878 = vmatprep.subr.mxu0 0.0
    %879 = vmatpush1.msra.mxu0 0.0
    %880 = vmatprep.subr.mxu0 0.0
    %881 = vmatpush1.msra.mxu0 0.0
    %882 = vmatprep.subr.mxu0 0.0
    %883 = vmatpush1.msra.mxu0 0.0
    %884 = vmatprep.subr.mxu0 0.0
    %885 = vmatpush1.msra.mxu0 0.0
    %886 = vmatprep.subr.mxu0 0.0
    %887 = vmatpush1.msra.mxu0 0.0
    %888 = vmatprep.subr.mxu0 0.0
    %889 = vmatpush1.msra.mxu0 0.0
    %890 = vmatprep.subr.mxu0 0.0
    %891 = vmatpush1.msra.mxu0 0.0
    %892 = vmatprep.subr.mxu0 0.0
    %893 = vmatpush1.msra.mxu0 0.0
    %894 = vmatprep.subr.mxu0 0.0
    %895 = vmatpush1.msra.mxu0 0.0
    %896 = vmatprep.subr.mxu0 0.0
    %897 = vmatpush1.msra.mxu0 0.0
    %898 = vmatprep.subr.mxu0 0.0
    %899 = vmatpush1.msra.mxu0 0.0
    %900 = vmatprep.subr.mxu0 0.0
    %901 = vmatpush1.msra.mxu0 0.0
    %902 = vmatprep.subr.mxu0 0.0
    %903 = vmatpush1.msra.mxu0 0.0
    %904 = vmatprep.subr.mxu0 0.0
    %905 = vmatpush1.msra.mxu0 0.0
    %906 = vmatprep.subr.mxu0 0.0
    %907 = vmatpush1.msra.mxu0 0.0
    %908 = vmatprep.subr.mxu0 0.0
    %909 = vmatpush1.msra.mxu0 0.0
    %910 = vmatprep.subr.mxu0 0.0
    %911 = vmatpush1.msra.mxu0 0.0
    %912 = vmatprep.subr.mxu0 0.0
    %913 = vmatpush1.msra.mxu0 0.0
    %914 = vmatprep.subr.mxu0 0.0
    %915 = vmatpush1.msra.mxu0 0.0
    %916 = vmatprep.subr.mxu0 0.0
    %917 = vmatpush1.msra.mxu0 0.0
    %918 = vmatprep.subr.mxu0 0.0
    %919 = vmatpush1.msra.mxu0 0.0
    %920 = vmatprep.subr.mxu0 0.0
    %921 = vmatpush1.msra.mxu0 0.0
    %922 = vmatprep.subr.mxu0 0.0
    %923 = vmatpush1.msra.mxu0 0.0
    %924 = vmatprep.mubr.f32.mxu0 0.0
    %925 = vmatmul.mubr.f32.gmra.mrb[0].mxu0 %v849
    %v926 = vpop.f32.mrb[0].mxu0
    %v927 = vadd.f32 0.0, %v926
    %v928 = vpop.f32.mrb[0].mxu0
    %929 = vmatprep.mubr.f32.mxu0 0.0
    %930 = vmatmul.mubr.f32.gmra.mrb[0].mxu0 %v852
    %v931 = vpop.f32.mrb[0].mxu0
    %v932 = vadd.f32 0.0, %v931
    %v933 = vpop.f32.mrb[0].mxu0
    %934 = vmatprep.mubr.f32.mxu0 0.0
    %935 = vmatmul.mubr.f32.gmra.mrb[0].mxu0 %v855
    %v936 = vpop.f32.mrb[0].mxu0
    %v937 = vadd.f32 0.0, %v936
    %v938 = vpop.f32.mrb[0].mxu0
    %939 = vmatprep.mubr.f32.mxu0 0.0
    %940 = vmatmul.mubr.f32.gmra.mrb[0].mxu0 %v858
    %v941 = vpop.f32.mrb[0].mxu0
    %v942 = vadd.f32 0.0, %v941
    %v943 = vpop.f32.mrb[0].mxu0
    %944 = vdwg.mxu0
    %945 = vmatprep.subr.mxu0 0.0
    %946 = vmatpush1.msra.mxu0 %v828
    %947 = vmatprep.subr.mxu0 0.0
    %948 = vmatpush1.msra.mxu0 %v829
    %949 = vmatprep.subr.mxu0 0.0
    %950 = vmatpush1.msra.mxu0 %v830
    %951 = vmatprep.subr.mxu0 0.0
    %952 = vmatpush1.msra.mxu0 %v831
    %953 = vmatprep.subr.mxu0 0.0
    %954 = vmatpush1.msra.mxu0 0.0
    %955 = vmatprep.subr.mxu0 0.0
    %956 = vmatpush1.msra.mxu0 0.0
    %957 = vmatprep.subr.mxu0 0.0
    %958 = vmatpush1.msra.mxu0 0.0
    %959 = vmatprep.subr.mxu0 0.0
    %960 = vmatpush1.msra.mxu0 0.0
    %961 = vmatprep.subr.mxu0 0.0
    %962 = vmatpush1.msra.mxu0 0.0
    %963 = vmatprep.subr.mxu0 0.0
    %964 = vmatpush1.msra.mxu0 0.0
    %965 = vmatprep.subr.mxu0 0.0
    %966 = vmatpush1.msra.mxu0 0.0
    %967 = vmatprep.subr.mxu0 0.0
    %968 = vmatpush1.msra.mxu0 0.0
    %969 = vmatprep.subr.mxu0 0.0
    %970 = vmatpush1.msra.mxu0 0.0
    %971 = vmatprep.subr.mxu0 0.0
    %972 = vmatpush1.msra.mxu0 0.0
    %973 = vmatprep.subr.mxu0 0.0
    %974 = vmatpush1.msra.mxu0 0.0
    %975 = vmatprep.subr.mxu0 0.0
    %976 = vmatpush1.msra.mxu0 0.0
    %977 = vmatprep.subr.mxu0 0.0
    %978 = vmatpush1.msra.mxu0 0.0
    %979 = vmatprep.subr.mxu0 0.0
    %980 = vmatpush1.msra.mxu0 0.0
    %981 = vmatprep.subr.mxu0 0.0
    %982 = vmatpush1.msra.mxu0 0.0
    %983 = vmatprep.subr.mxu0 0.0
    %984 = vmatpush1.msra.mxu0 0.0
    %985 = vmatprep.subr.mxu0 0.0
    %986 = vmatpush1.msra.mxu0 0.0
    %987 = vmatprep.subr.mxu0 0.0
    %988 = vmatpush1.msra.mxu0 0.0
    %989 = vmatprep.subr.mxu0 0.0
    %990 = vmatpush1.msra.mxu0 0.0
    %991 = vmatprep.subr.mxu0 0.0
    %992 = vmatpush1.msra.mxu0 0.0
    %993 = vmatprep.subr.mxu0 0.0
    %994 = vmatpush1.msra.mxu0 0.0
    %995 = vmatprep.subr.mxu0 0.0
    %996 = vmatpush1.msra.mxu0 0.0
    %997 = vmatprep.subr.mxu0 0.0
    %998 = vmatpush1.msra.mxu0 0.0
    %999 = vmatprep.subr.mxu0 0.0
    %1000 = vmatpush1.msra.mxu0 0.0
    %1001 = vmatprep.subr.mxu0 0.0
    %1002 = vmatpush1.msra.mxu0 0.0
    %1003 = vmatprep.subr.mxu0 0.0
    %1004 = vmatpush1.msra.mxu0 0.0
    %1005 = vmatprep.subr.mxu0 0.0
    %1006 = vmatpush1.msra.mxu0 0.0
    %1007 = vmatprep.subr.mxu0 0.0
    %1008 = vmatpush1.msra.mxu0 0.0
    %1009 = vmatprep.mubr.f32.mxu0 0.0
    %1010 = vmatmul.mubr.f32.gmra.mrb[0].mxu0 %v35
    %v1011 = vpop.f32.mrb[0].mxu0
    %v1012 = vadd.f32 %v927, %v1011
    %v1013 = vpop.f32.mrb[0].mxu0
    %1014 = vmatprep.mubr.f32.mxu0 0.0
    %1015 = vmatmul.mubr.f32.gmra.mrb[0].mxu0 %v38
    %v1016 = vpop.f32.mrb[0].mxu0
    %v1017 = vadd.f32 %v932, %v1016
    %v1018 = vpop.f32.mrb[0].mxu0
    %1019 = vmatprep.mubr.f32.mxu0 0.0
    %1020 = vmatmul.mubr.f32.gmra.mrb[0].mxu0 %v41
    %v1021 = vpop.f32.mrb[0].mxu0
    %v1022 = vadd.f32 %v937, %v1021
    %v1023 = vpop.f32.mrb[0].mxu0
    %1024 = vmatprep.mubr.f32.mxu0 0.0
    %1025 = vmatmul.mubr.f32.gmra.mrb[0].mxu0 %v44
    %v1026 = vpop.f32.mrb[0].mxu0
    %v1027 = vadd.f32 %v942, %v1026
    %v1028 = vpop.f32.mrb[0].mxu0
    %1029 = vdwg.mxu0
    %vm1030 = vcmp.gt.f32.partialorder %v1012, 0.0
    %vm1031 = vcmp.gt.f32.partialorder %v1017, 0.0
    %vm1032 = vcmp.gt.f32.partialorder %v1022, 0.0
    %vm1033 = vcmp.gt.f32.partialorder %v1027, 0.0
    %v1034 = vmul.f32 %v1012, 0.1
    %v1035 = vmul.f32 %v1017, 0.1
    %v1036 = vmul.f32 %v1022, 0.1
    %v1037 = vmul.f32 %v1027, 0.1
    %v1038 = vsel %vm1030, %v1012, %v1034
    %v1039 = vsel %vm1031, %v1017, %v1035
    %v1040 = vsel %vm1032, %v1022, %v1036
    %v1041 = vsel %vm1033, %v1027, %v1037
    %v1042 = vld [vmem:[%s2] sm:$0xff]
    %v1043 = vld [vmem:[%s2 + $0x8] sm:$0xff]
    %v1044 = vld [vmem:[%s2 + $0x10] sm:$0xff]
    %v1045 = vld [vmem:[%s2 + $0x18] sm:$0xff]
    %v1046 = vld [vmem:[%s2 + $0x20] sm:$0xff]
    %v1047 = vld [vmem:[%s2 + $0x28] sm:$0xff]
    %v1048 = vld [vmem:[%s2 + $0x30] sm:$0xff]
    %v1049 = vld [vmem:[%s2 + $0x38] sm:$0xff]
    %vm1050 = vcmask 523264
    %v1052 = vsel %vm1050, %v1038, 0
    %v1055 = vsel %vm1050, %v1039, 0
    %v1058 = vsel %vm1050, %v1040, 0
    %v1061 = vsel %vm1050, %v1041, 0
    %1063 = vmatprep.subr.mxu0 0.0
    %1064 = vmatpush1.msra.mxu0 %v1042
    %1065 = vmatprep.subr.mxu0 0.0
    %1066 = vmatpush1.msra.mxu0 %v1043
    %1067 = vmatprep.subr.mxu0 0.0
    %1068 = vmatpush1.msra.mxu0 %v1044
    %1069 = vmatprep.subr.mxu0 0.0
    %1070 = vmatpush1.msra.mxu0 %v1045
    %1071 = vmatprep.subr.mxu0 0.0
    %1072 = vmatpush1.msra.mxu0 %v1046
    %1073 = vmatprep.subr.mxu0 0.0
    %1074 = vmatpush1.msra.mxu0 %v1047
    %1075 = vmatprep.subr.mxu0 0.0
    %1076 = vmatpush1.msra.mxu0 %v1048
    %1077 = vmatprep.subr.mxu0 0.0
    %1078 = vmatpush1.msra.mxu0 %v1049
    %1079 = vmatprep.subr.mxu0 0.0
    %1080 = vmatpush1.msra.mxu0 0.0
    %1081 = vmatprep.subr.mxu0 0.0
    %1082 = vmatpush1.msra.mxu0 0.0
    %1083 = vmatprep.subr.mxu0 0.0
    %1084 = vmatpush1.msra.mxu0 0.0
    %1085 = vmatprep.subr.mxu0 0.0
    %1086 = vmatpush1.msra.mxu0 0.0
    %1087 = vmatprep.subr.mxu0 0.0
    %1088 = vmatpush1.msra.mxu0 0.0
    %1089 = vmatprep.subr.mxu0 0.0
    %1090 = vmatpush1.msra.mxu0 0.0
    %1091 = vmatprep.subr.mxu0 0.0
    %1092 = vmatpush1.msra.mxu0 0.0
    %1093 = vmatprep.subr.mxu0 0.0
    %1094 = vmatpush1.msra.mxu0 0.0
    %1095 = vmatprep.subr.mxu0 0.0
    %1096 = vmatpush1.msra.mxu0 0.0
    %1097 = vmatprep.subr.mxu0 0.0
    %1098 = vmatpush1.msra.mxu0 0.0
    %1099 = vmatprep.subr.mxu0 0.0
    %1100 = vmatpush1.msra.mxu0 0.0
    %1101 = vmatprep.subr.mxu0 0.0
    %1102 = vmatpush1.msra.mxu0 0.0
    %1103 = vmatprep.subr.mxu0 0.0
    %1104 = vmatpush1.msra.mxu0 0.0
    %1105 = vmatprep.subr.mxu0 0.0
    %1106 = vmatpush1.msra.mxu0 0.0
    %1107 = vmatprep.subr.mxu0 0.0
    %1108 = vmatpush1.msra.mxu0 0.0
    %1109 = vmatprep.subr.mxu0 0.0
    %1110 = vmatpush1.msra.mxu0 0.0
    %1111 = vmatprep.subr.mxu0 0.0
    %1112 = vmatpush1.msra.mxu0 0.0
    %1113 = vmatprep.subr.mxu0 0.0
    %1114 = vmatpush1.msra.mxu0 0.0
    %1115 = vmatprep.subr.mxu0 0.0
    %1116 = vmatpush1.msra.mxu0 0.0
    %1117 = vmatprep.subr.mxu0 0.0
    %1118 = vmatpush1.msra.mxu0 0.0
    %1119 = vmatprep.subr.mxu0 0.0
    %1120 = vmatpush1.msra.mxu0 0.0
    %1121 = vmatprep.subr.mxu0 0.0
    %1122 = vmatpush1.msra.mxu0 0.0
    %1123 = vmatprep.subr.mxu0 0.0
    %1124 = vmatpush1.msra.mxu0 0.0
    %1125 = vmatprep.subr.mxu0 0.0
    %1126 = vmatpush1.msra.mxu0 0.0
    %1127 = vmatprep.mubr.f32.mxu0 0.0
    %1128 = vmatmul.mubr.f32.gmra.mrb[0].mxu0 %v1052
    %v1129 = vpop.f32.mrb[0].mxu0
    %v1130 = vadd.f32 0.0, %v1129
    %v1131 = vpop.f32.mrb[0].mxu0
    %1132 = vmatprep.mubr.f32.mxu0 0.0
    %1133 = vmatmul.mubr.f32.gmra.mrb[0].mxu0 %v1055
    %v1134 = vpop.f32.mrb[0].mxu0
    %v1135 = vadd.f32 0.0, %v1134
    %v1136 = vpop.f32.mrb[0].mxu0
    %1137 = vmatprep.mubr.f32.mxu0 0.0
    %1138 = vmatmul.mubr.f32.gmra.mrb[0].mxu0 %v1058
    %v1139 = vpop.f32.mrb[0].mxu0
    %v1140 = vadd.f32 0.0, %v1139
    %v1141 = vpop.f32.mrb[0].mxu0
    %1142 = vmatprep.mubr.f32.mxu0 0.0
    %1143 = vmatmul.mubr.f32.gmra.mrb[0].mxu0 %v1061
    %v1144 = vpop.f32.mrb[0].mxu0
    %v1145 = vadd.f32 0.0, %v1144
    %v1146 = vpop.f32.mrb[0].mxu0
    %1147 = vdwg.mxu0
    %v1148 = vld [vmem:[%s3 + $0x2] sm:$0x1]
    %v1149 = vld [vmem:[%s3 + $0x3] sm:$0x1]
    %v1150 = vsel %vm33, %v1130, 0.0
    %1151 = vadd.xlane.f32.xlu0 %v1150
    %v1152 = vpop.xlane.xlu0 %1151
    %v1153 = vsel %vm33, %v1135, 0.0
    %1154 = vadd.xlane.f32.xlu0 %v1153
    %v1155 = vpop.xlane.xlu0 %1154
    %v1156 = vsel %vm33, %v1140, 0.0
    %1157 = vadd.xlane.f32.xlu0 %v1156
    %v1158 = vpop.xlane.xlu0 %1157
    %v1159 = vsel %vm33, %v1145, 0.0
    %1160 = vadd.xlane.f32.xlu0 %v1159
    %v1161 = vpop.xlane.xlu0 %1160
    %v1162 = vmul.f32 %v1152, %v771
    %v1163 = vmul.f32 %v1155, %v771
    %v1164 = vmul.f32 %v1158, %v771
    %v1165 = vmul.f32 %v1161, %v771
    %v1166 = vsub.f32 %v1130, %v1162
    %v1167 = vsub.f32 %v1135, %v1163
    %v1168 = vsub.f32 %v1140, %v1164
    %v1169 = vsub.f32 %v1145, %v1165
    %v1170 = vmul.f32 %v1166, %v1166
    %v1171 = vmul.f32 %v1167, %v1167
    %v1172 = vmul.f32 %v1168, %v1168
    %v1173 = vmul.f32 %v1169, %v1169
    %v1174 = vsel %vm33, %v1170, 0.0
    %1175 = vadd.xlane.f32.xlu0 %v1174
    %v1176 = vpop.xlane.xlu0 %1175
    %v1177 = vsel %vm33, %v1171, 0.0
    %1178 = vadd.xlane.f32.xlu0 %v1177
    %v1179 = vpop.xlane.xlu0 %1178
    %v1180 = vsel %vm33, %v1172, 0.0
    %1181 = vadd.xlane.f32.xlu0 %v1180
    %v1182 = vpop.xlane.xlu0 %1181
    %v1183 = vsel %vm33, %v1173, 0.0
    %1184 = vadd.xlane.f32.xlu0 %v1183
    %v1185 = vpop.xlane.xlu0 %1184
    %v1186 = vmul.f32 %v1176, %v771
    %v1187 = vmul.f32 %v1179, %v771
    %v1188 = vmul.f32 %v1182, %v771
    %v1189 = vmul.f32 %v1185, %v771
    %v1190 = vadd.f32 %v1186, 1e-05
    %v1191 = vadd.f32 %v1187, 1e-05
    %v1192 = vadd.f32 %v1188, 1e-05
    %v1193 = vadd.f32 %v1189, 1e-05
    %v1194 = vrsqrt.pop %v1190
    %v1195 = vrsqrt.pop %v1191
    %v1196 = vrsqrt.pop %v1192
    %v1197 = vrsqrt.pop %v1193
    %v1198 = vmul.f32 %v1166, %v1194
    %v1199 = vmul.f32 %v1167, %v1195
    %v1200 = vmul.f32 %v1168, %v1196
    %v1201 = vmul.f32 %v1169, %v1197
    %v1202 = vlaneseq
    %v1203 = vshrl.u32 %v1202, 7
    %v1204 = vsub.s32 0, %v1203
    %v1205 = vrot.slane %v1148, %v1204
    %v1206 = vmul.f32 %v1198, %v1205
    %v1207 = vmul.f32 %v1199, %v1205
    %v1208 = vmul.f32 %v1200, %v1205
    %v1209 = vmul.f32 %v1201, %v1205
    %v1210 = vlaneseq
    %v1211 = vshrl.u32 %v1210, 7
    %v1212 = vsub.s32 0, %v1211
    %v1213 = vrot.slane %v1149, %v1212
    %v1214 = vadd.f32 %v1206, %v1213
    %v1215 = vadd.f32 %v1207, %v1213
    %v1216 = vadd.f32 %v1208, %v1213
    %v1217 = vadd.f32 %v1209, %v1213
    %v1218 = vadd.f32 %v21, %v1214
    %v1219 = vadd.f32 %v22, %v1215
    %v1220 = vadd.f32 %v23, %v1216
    %v1221 = vadd.f32 %v24, %v1217
    %v1223 = vsel %vm33, %v1218, 0
    %v1226 = vsel %vm33, %v1219, 0
    %v1229 = vsel %vm33, %v1220, 0
    %v1232 = vsel %vm33, %v1221, 0
    %1234 = vmatprep.subr.mxu0 0.0
    %1235 = vmatpush1.msra.mxu0 %v29
    %1236 = vmatprep.subr.mxu0 0.0
    %1237 = vmatpush1.msra.mxu0 %v30
    %1238 = vmatprep.subr.mxu0 0.0
    %1239 = vmatpush1.msra.mxu0 %v31
    %1240 = vmatprep.subr.mxu0 0.0
    %1241 = vmatpush1.msra.mxu0 %v32
    %1242 = vmatprep.subr.mxu0 0.0
    %1243 = vmatpush1.msra.mxu0 0.0
    %1244 = vmatprep.subr.mxu0 0.0
    %1245 = vmatpush1.msra.mxu0 0.0
    %1246 = vmatprep.subr.mxu0 0.0
    %1247 = vmatpush1.msra.mxu0 0.0
    %1248 = vmatprep.subr.mxu0 0.0
    %1249 = vmatpush1.msra.mxu0 0.0
    %1250 = vmatprep.subr.mxu0 0.0
    %1251 = vmatpush1.msra.mxu0 0.0
    %1252 = vmatprep.subr.mxu0 0.0
    %1253 = vmatpush1.msra.mxu0 0.0
    %1254 = vmatprep.subr.mxu0 0.0
    %1255 = vmatpush1.msra.mxu0 0.0
    %1256 = vmatprep.subr.mxu0 0.0
    %1257 = vmatpush1.msra.mxu0 0.0
    %1258 = vmatprep.subr.mxu0 0.0
    %1259 = vmatpush1.msra.mxu0 0.0
    %1260 = vmatprep.subr.mxu0 0.0
    %1261 = vmatpush1.msra.mxu0 0.0
    %1262 = vmatprep.subr.mxu0 0.0
    %1263 = vmatpush1.msra.mxu0 0.0
    %1264 = vmatprep.subr.mxu0 0.0
    %1265 = vmatpush1.msra.mxu0 0.0
    %1266 = vmatprep.subr.mxu0 0.0
    %1267 = vmatpush1.msra.mxu0 0.0
    %1268 = vmatprep.subr.mxu0 0.0
    %1269 = vmatpush1.msra.mxu0 0.0
    %1270 = vmatprep.subr.mxu0 0.0
    %1271 = vmatpush1.msra.mxu0 0.0
    %1272 = vmatprep.subr.mxu0 0.0
    %1273 = vmatpush1.msra.mxu0 0.0
    %1274 = vmatprep.subr.mxu0 0.0
    %1275 = vmatpush1.msra.mxu0 0.0
    %1276 = vmatprep.subr.mxu0 0.0
    %1277 = vmatpush1.msra.mxu0 0.0
    %1278 = vmatprep.subr.mxu0 0.0
    %1279 = vmatpush1.msra.mxu0 0.0
    %1280 = vmatprep.subr.mxu0 0.0
    %1281 = vmatpush1.msra.mxu0 0.0
    %1282 = vmatprep.subr.mxu0 0.0
    %1283 = vmatpush1.msra.mxu0 0.0
    %1284 = vmatprep.subr.mxu0 0.0
    %1285 = vmatpush1.msra.mxu0 0.0
    %1286 = vmatprep.subr.mxu0 0.0
    %1287 = vmatpush1.msra.mxu0 0.0
    %1288 = vmatprep.subr.mxu0 0.0
    %1289 = vmatpush1.msra.mxu0 0.0
    %1290 = vmatprep.subr.mxu0 0.0
    %1291 = vmatpush1.msra.mxu0 0.0
    %1292 = vmatprep.subr.mxu0 0.0
    %1293 = vmatpush1.msra.mxu0 0.0
    %1294 = vmatprep.subr.mxu0 0.0
    %1295 = vmatpush1.msra.mxu0 0.0
    %1296 = vmatprep.subr.mxu0 0.0
    %1297 = vmatpush1.msra.mxu0 0.0
    %1298 = vmatprep.mubr.f32.mxu0 0.0
    %1299 = vmatmul.mubr.f32.gmra.mrb[0].mxu0 %v1223
    %v1300 = vpop.f32.mrb[0].mxu0
    %v1301 = vadd.f32 0.0, %v1300
    %v1302 = vpop.f32.mrb[0].mxu0
    %1303 = vmatprep.mubr.f32.mxu0 0.0
    %1304 = vmatmul.mubr.f32.gmra.mrb[0].mxu0 %v1226
    %v1305 = vpop.f32.mrb[0].mxu0
    %v1306 = vadd.f32 0.0, %v1305
    %v1307 = vpop.f32.mrb[0].mxu0
    %1308 = vmatprep.mubr.f32.mxu0 0.0
    %1309 = vmatmul.mubr.f32.gmra.mrb[0].mxu0 %v1229
    %v1310 = vpop.f32.mrb[0].mxu0
    %v1311 = vadd.f32 0.0, %v1310
    %v1312 = vpop.f32.mrb[0].mxu0
    %1313 = vmatprep.mubr.f32.mxu0 0.0
    %1314 = vmatmul.mubr.f32.gmra.mrb[0].mxu0 %v1232
    %v1315 = vpop.f32.mrb[0].mxu0
    %v1316 = vadd.f32 0.0, %v1315
    %v1317 = vpop.f32.mrb[0].mxu0
    %1318 = vdwg.mxu0
    %vm1319 = vcmp.gt.f32.partialorder %v1301, 0.0
    %vm1320 = vcmp.gt.f32.partialorder %v1306, 0.0
    %vm1321 = vcmp.gt.f32.partialorder %v1311, 0.0
    %vm1322 = vcmp.gt.f32.partialorder %v1316, 0.0
    %v1323 = vadd.f32 %v1301, 1.0
    %v1324 = vadd.f32 %v1306, 1.0
    %v1325 = vadd.f32 %v1311, 1.0
    %v1326 = vadd.f32 %v1316, 1.0
    %v1327 = vmin.f32 %v1301, 0.0
    %v1328 = vmin.f32 %v1306, 0.0
    %v1329 = vmin.f32 %v1311, 0.0
    %v1330 = vmin.f32 %v1316, 0.0
    %v1331 = vmul.f32 %v1327, 1.442695
    %v1332 = vpow.pop %v1331
    %v1333 = vmul.f32 %v1328, 1.442695
    %v1334 = vpow.pop %v1333
    %v1335 = vmul.f32 %v1329, 1.442695
    %v1336 = vpow.pop %v1335
    %v1337 = vmul.f32 %v1330, 1.442695
    %v1338 = vpow.pop %v1337
    %v1339 = vsel %vm1319, %v1323, %v1332
    %v1340 = vsel %vm1320, %v1324, %v1334
    %v1341 = vsel %vm1321, %v1325, %v1336
    %v1342 = vsel %vm1322, %v1326, %v1338
    %1345 = vrot.lane.b32.xlu0 %v1301, 64
    %v1346 = vpop.permute.xlu0 %1345
    %1347 = vrot.lane.b32.xlu0 %v1306, 64
    %v1348 = vpop.permute.xlu0 %1347
    %v1351 = vsel %vm33, %v1346, 1.0
    %v1352 = vsel %vm33, %v1348, 1.0
    %1355 = vrot.lane.b32.xlu0 %v1339, 96
    %v1356 = vpop.permute.xlu0 %1355
    %1357 = vrot.lane.b32.xlu0 %v1340, 96
    %v1358 = vpop.permute.xlu0 %1357
    %1361 = vxpose.xlu0.b32.start [1/16] %v1356, 128
    %1362 = vxpose.xlu0.b32.cont [2/16] %v1358, 128
    %1363 = vxpose.xlu0.b32.cont [3/16] 0.0, 128
    %1364 = vxpose.xlu0.b32.cont [4/16] 0.0, 128
    %1365 = vxpose.xlu0.b32.cont [5/16] 0.0, 128
    %1366 = vxpose.xlu0.b32.cont [6/16] 0.0, 128
    %1367 = vxpose.xlu0.b32.cont [7/16] 0.0, 128
    %1368 = vxpose.xlu0.b32.cont [8/16] 0.0, 128
    %1369 = vxpose.xlu0.b32.cont [9/16] 0.0, 128
    %1370 = vxpose.xlu0.b32.cont [10/16] 0.0, 128
    %1371 = vxpose.xlu0.b32.cont [11/16] 0.0, 128
    %1372 = vxpose.xlu0.b32.cont [12/16] 0.0, 128
    %1373 = vxpose.xlu0.b32.cont [13/16] 0.0, 128
    %1374 = vxpose.xlu0.b32.cont [14/16] 0.0, 128
    %1375 = vxpose.xlu0.b32.cont [15/16] 0.0, 128
    %1376 = vxpose.xlu0.b32.end [16/16] 0.0, 128
    %v1377 = vpop.trf.xlu0
    %v1378 = vpop.trf.xlu0
    %v1379 = vpop.trf.xlu0
    %v1380 = vpop.trf.xlu0
    %v1381 = vpop.trf.xlu0
    %v1382 = vpop.trf.xlu0
    %v1383 = vpop.trf.xlu0
    %v1384 = vpop.trf.xlu0
    %v1385 = vpop.trf.xlu0
    %v1386 = vpop.trf.xlu0
    %v1387 = vpop.trf.xlu0
    %v1388 = vpop.trf.xlu0
    %v1389 = vpop.trf.xlu0
    %v1390 = vpop.trf.xlu0
    %v1391 = vpop.trf.xlu0
    %v1392 = vpop.trf.xlu0
    %v1394 = vsel %vm205, %v1377, 0
    %v1397 = vsel %vm205, %v1378, 0
    %v1400 = vsel %vm205, %v1379, 0
    %v1403 = vsel %vm205, %v1380, 0
    %1405 = vmatprep.subr.mxu0 0.0
    %1406 = vmatpush1.msra.mxu0 %v1351
    %1407 = vmatprep.subr.mxu0 0.0
    %1408 = vmatpush1.msra.mxu0 %v1352
    %1409 = vmatprep.subr.mxu0 0.0
    %1410 = vmatpush1.msra.mxu0 0.0
    %1411 = vmatprep.subr.mxu0 0.0
    %1412 = vmatpush1.msra.mxu0 0.0
    %1413 = vmatprep.subr.mxu0 0.0
    %1414 = vmatpush1.msra.mxu0 0.0
    %1415 = vmatprep.subr.mxu0 0.0
    %1416 = vmatpush1.msra.mxu0 0.0
    %1417 = vmatprep.subr.mxu0 0.0
    %1418 = vmatpush1.msra.mxu0 0.0
    %1419 = vmatprep.subr.mxu0 0.0
    %1420 = vmatpush1.msra.mxu0 0.0
    %1421 = vmatprep.subr.mxu0 0.0
    %1422 = vmatpush1.msra.mxu0 0.0
    %1423 = vmatprep.subr.mxu0 0.0
    %1424 = vmatpush1.msra.mxu0 0.0
    %1425 = vmatprep.subr.mxu0 0.0
    %1426 = vmatpush1.msra.mxu0 0.0
    %1427 = vmatprep.subr.mxu0 0.0
    %1428 = vmatpush1.msra.mxu0 0.0
    %1429 = vmatprep.subr.mxu0 0.0
    %1430 = vmatpush1.msra.mxu0 0.0
    %1431 = vmatprep.subr.mxu0 0.0
    %1432 = vmatpush1.msra.mxu0 0.0
    %1433 = vmatprep.subr.mxu0 0.0
    %1434 = vmatpush1.msra.mxu0 0.0
    %1435 = vmatprep.subr.mxu0 0.0
    %1436 = vmatpush1.msra.mxu0 0.0
    %1437 = vmatprep.subr.mxu0 0.0
    %1438 = vmatpush1.msra.mxu0 0.0
    %1439 = vmatprep.subr.mxu0 0.0
    %1440 = vmatpush1.msra.mxu0 0.0
    %1441 = vmatprep.subr.mxu0 0.0
    %1442 = vmatpush1.msra.mxu0 0.0
    %1443 = vmatprep.subr.mxu0 0.0
    %1444 = vmatpush1.msra.mxu0 0.0
    %1445 = vmatprep.subr.mxu0 0.0
    %1446 = vmatpush1.msra.mxu0 0.0
    %1447 = vmatprep.subr.mxu0 0.0
    %1448 = vmatpush1.msra.mxu0 0.0
    %1449 = vmatprep.subr.mxu0 0.0
    %1450 = vmatpush1.msra.mxu0 0.0
    %1451 = vmatprep.subr.mxu0 0.0
    %1452 = vmatpush1.msra.mxu0 0.0
    %1453 = vmatprep.subr.mxu0 0.0
    %1454 = vmatpush1.msra.mxu0 0.0
    %1455 = vmatprep.subr.mxu0 0.0
    %1456 = vmatpush1.msra.mxu0 0.0
    %1457 = vmatprep.subr.mxu0 0.0
    %1458 = vmatpush1.msra.mxu0 0.0
    %1459 = vmatprep.subr.mxu0 0.0
    %1460 = vmatpush1.msra.mxu0 0.0
    %1461 = vmatprep.subr.mxu0 0.0
    %1462 = vmatpush1.msra.mxu0 0.0
    %1463 = vmatprep.subr.mxu0 0.0
    %1464 = vmatpush1.msra.mxu0 0.0
    %1465 = vmatprep.subr.mxu0 0.0
    %1466 = vmatpush1.msra.mxu0 0.0
    %1467 = vmatprep.subr.mxu0 0.0
    %1468 = vmatpush1.msra.mxu0 0.0
    %1469 = vmatprep.mubr.f32.mxu0 0.0
    %1470 = vmatmul.mubr.f32.gmra.mrb[0].mxu0 %v1394
    %v1471 = vpop.f32.mrb[0].mxu0
    %v1472 = vadd.f32 0.0, %v1471
    %v1473 = vpop.f32.mrb[0].mxu0
    %1474 = vmatprep.mubr.f32.mxu0 0.0
    %1475 = vmatmul.mubr.f32.gmra.mrb[0].mxu0 %v1397
    %v1476 = vpop.f32.mrb[0].mxu0
    %v1477 = vadd.f32 0.0, %v1476
    %v1478 = vpop.f32.mrb[0].mxu0
    %1479 = vmatprep.mubr.f32.mxu0 0.0
    %1480 = vmatmul.mubr.f32.gmra.mrb[0].mxu0 %v1400
    %v1481 = vpop.f32.mrb[0].mxu0
    %v1482 = vadd.f32 0.0, %v1481
    %v1483 = vpop.f32.mrb[0].mxu0
    %1484 = vmatprep.mubr.f32.mxu0 0.0
    %1485 = vmatmul.mubr.f32.gmra.mrb[0].mxu0 %v1403
    %v1486 = vpop.f32.mrb[0].mxu0
    %v1487 = vadd.f32 0.0, %v1486
    %v1488 = vpop.f32.mrb[0].mxu0
    %1489 = vdwg.mxu0
    %v1490 = vmul.f32 %v1472, %v25
    %v1491 = vmul.f32 %v1477, %v26
    %v1492 = vmul.f32 %v1482, %v27
    %v1493 = vmul.f32 %v1487, %v28
    %v1494 = vsel %vm33, %v1339, 0
    %v1496 = vsel %vm33, %v1340, 0
    %1498 = vmatprep.subr.mxu0 0.0
    %1499 = vmatpush1.msra.mxu0 %v1490
    %1500 = vmatprep.subr.mxu0 0.0
    %1501 = vmatpush1.msra.mxu0 %v1491
    %1502 = vmatprep.subr.mxu0 0.0
    %1503 = vmatpush1.msra.mxu0 %v1492
    %1504 = vmatprep.subr.mxu0 0.0
    %1505 = vmatpush1.msra.mxu0 %v1493
    %1506 = vmatprep.subr.mxu0 0.0
    %1507 = vmatpush1.msra.mxu0 0.0
    %1508 = vmatprep.subr.mxu0 0.0
    %1509 = vmatpush1.msra.mxu0 0.0
    %1510 = vmatprep.subr.mxu0 0.0
    %1511 = vmatpush1.msra.mxu0 0.0
    %1512 = vmatprep.subr.mxu0 0.0
    %1513 = vmatpush1.msra.mxu0 0.0
    %1514 = vmatprep.subr.mxu0 0.0
    %1515 = vmatpush1.msra.mxu0 0.0
    %1516 = vmatprep.subr.mxu0 0.0
    %1517 = vmatpush1.msra.mxu0 0.0
    %1518 = vmatprep.subr.mxu0 0.0
    %1519 = vmatpush1.msra.mxu0 0.0
    %1520 = vmatprep.subr.mxu0 0.0
    %1521 = vmatpush1.msra.mxu0 0.0
    %1522 = vmatprep.subr.mxu0 0.0
    %1523 = vmatpush1.msra.mxu0 0.0
    %1524 = vmatprep.subr.mxu0 0.0
    %1525 = vmatpush1.msra.mxu0 0.0
    %1526 = vmatprep.subr.mxu0 0.0
    %1527 = vmatpush1.msra.mxu0 0.0
    %1528 = vmatprep.subr.mxu0 0.0
    %1529 = vmatpush1.msra.mxu0 0.0
    %1530 = vmatprep.subr.mxu0 0.0
    %1531 = vmatpush1.msra.mxu0 0.0
    %1532 = vmatprep.subr.mxu0 0.0
    %1533 = vmatpush1.msra.mxu0 0.0
    %1534 = vmatprep.subr.mxu0 0.0
    %1535 = vmatpush1.msra.mxu0 0.0
    %1536 = vmatprep.subr.mxu0 0.0
    %1537 = vmatpush1.msra.mxu0 0.0
    %1538 = vmatprep.subr.mxu0 0.0
    %1539 = vmatpush1.msra.mxu0 0.0
    %1540 = vmatprep.subr.mxu0 0.0
    %1541 = vmatpush1.msra.mxu0 0.0
    %1542 = vmatprep.subr.mxu0 0.0
    %1543 = vmatpush1.msra.mxu0 0.0
    %1544 = vmatprep.subr.mxu0 0.0
    %1545 = vmatpush1.msra.mxu0 0.0
    %1546 = vmatprep.subr.mxu0 0.0
    %1547 = vmatpush1.msra.mxu0 0.0
    %1548 = vmatprep.subr.mxu0 0.0
    %1549 = vmatpush1.msra.mxu0 0.0
    %1550 = vmatprep.subr.mxu0 0.0
    %1551 = vmatpush1.msra.mxu0 0.0
    %1552 = vmatprep.subr.mxu0 0.0
    %1553 = vmatpush1.msra.mxu0 0.0
    %1554 = vmatprep.subr.mxu0 0.0
    %1555 = vmatpush1.msra.mxu0 0.0
    %1556 = vmatprep.subr.mxu0 0.0
    %1557 = vmatpush1.msra.mxu0 0.0
    %1558 = vmatprep.subr.mxu0 0.0
    %1559 = vmatpush1.msra.mxu0 0.0
    %1560 = vmatprep.subr.mxu0 0.0
    %1561 = vmatpush1.msra.mxu0 0.0
    %1562 = vmatprep.mubr.f32.mxu0 0.0
    %1563 = vmatmul.mubr.f32.gmra.mrb[0].mxu0 %v1494
    %v1564 = vpop.f32.mrb[0].mxu0
    %v1565 = vadd.f32 0.0, %v1564
    %v1566 = vpop.f32.mrb[0].mxu0
    %1567 = vmatprep.mubr.f32.mxu0 0.0
    %1568 = vmatmul.mubr.f32.gmra.mrb[0].mxu0 %v1496
    %v1569 = vpop.f32.mrb[0].mxu0
    %v1570 = vadd.f32 0.0, %v1569
    %v1571 = vpop.f32.mrb[0].mxu0
    %1572 = vdwg.mxu0
    %v1573 = vadd.f32 %v1565, 1e-06
    %v1574 = vadd.f32 %v1570, 1e-06
    %v1575 = vrcp.pop %v1573
    %v1576 = vrcp.pop %v1574
    %1579 = vrot.lane.b32.xlu0 %v1575, 96
    %v1580 = vpop.permute.xlu0 %1579
    %1581 = vrot.lane.b32.xlu0 %v1576, 96
    %v1582 = vpop.permute.xlu0 %1581
    %v1585 = vmul.f32 %v1565, %v1580
    %v1586 = vmul.f32 %v1570, %v1582
    %1589 = vrot.lane.b32.xlu0 %v1311, 64
    %v1590 = vpop.permute.xlu0 %1589
    %1591 = vrot.lane.b32.xlu0 %v1316, 64
    %v1592 = vpop.permute.xlu0 %1591
    %v1595 = vsel %vm33, %v1590, 1.0
    %v1596 = vsel %vm33, %v1592, 1.0
    %1599 = vrot.lane.b32.xlu0 %v1341, 96
    %v1600 = vpop.permute.xlu0 %1599
    %1601 = vrot.lane.b32.xlu0 %v1342, 96
    %v1602 = vpop.permute.xlu0 %1601
    %1605 = vxpose.xlu0.b32.start [1/16] %v1600, 128
    %1606 = vxpose.xlu0.b32.cont [2/16] %v1602, 128
    %1607 = vxpose.xlu0.b32.cont [3/16] 0.0, 128
    %1608 = vxpose.xlu0.b32.cont [4/16] 0.0, 128
    %1609 = vxpose.xlu0.b32.cont [5/16] 0.0, 128
    %1610 = vxpose.xlu0.b32.cont [6/16] 0.0, 128
    %1611 = vxpose.xlu0.b32.cont [7/16] 0.0, 128
    %1612 = vxpose.xlu0.b32.cont [8/16] 0.0, 128
    %1613 = vxpose.xlu0.b32.cont [9/16] 0.0, 128
    %1614 = vxpose.xlu0.b32.cont [10/16] 0.0, 128
    %1615 = vxpose.xlu0.b32.cont [11/16] 0.0, 128
    %1616 = vxpose.xlu0.b32.cont [12/16] 0.0, 128
    %1617 = vxpose.xlu0.b32.cont [13/16] 0.0, 128
    %1618 = vxpose.xlu0.b32.cont [14/16] 0.0, 128
    %1619 = vxpose.xlu0.b32.cont [15/16] 0.0, 128
    %1620 = vxpose.xlu0.b32.end [16/16] 0.0, 128
    %v1621 = vpop.trf.xlu0
    %v1622 = vpop.trf.xlu0
    %v1623 = vpop.trf.xlu0
    %v1624 = vpop.trf.xlu0
    %v1625 = vpop.trf.xlu0
    %v1626 = vpop.trf.xlu0
    %v1627 = vpop.trf.xlu0
    %v1628 = vpop.trf.xlu0
    %v1629 = vpop.trf.xlu0
    %v1630 = vpop.trf.xlu0
    %v1631 = vpop.trf.xlu0
    %v1632 = vpop.trf.xlu0
    %v1633 = vpop.trf.xlu0
    %v1634 = vpop.trf.xlu0
    %v1635 = vpop.trf.xlu0
    %v1636 = vpop.trf.xlu0
    %v1638 = vsel %vm205, %v1621, 0
    %v1641 = vsel %vm205, %v1622, 0
    %v1644 = vsel %vm205, %v1623, 0
    %v1647 = vsel %vm205, %v1624, 0
    %1649 = vmatprep.subr.mxu0 0.0
    %1650 = vmatpush1.msra.mxu0 %v1595
    %1651 = vmatprep.subr.mxu0 0.0
    %1652 = vmatpush1.msra.mxu0 %v1596
    %1653 = vmatprep.subr.mxu0 0.0
    %1654 = vmatpush1.msra.mxu0 0.0
    %1655 = vmatprep.subr.mxu0 0.0
    %1656 = vmatpush1.msra.mxu0 0.0
    %1657 = vmatprep.subr.mxu0 0.0
    %1658 = vmatpush1.msra.mxu0 0.0
    %1659 = vmatprep.subr.mxu0 0.0
    %1660 = vmatpush1.msra.mxu0 0.0
    %1661 = vmatprep.subr.mxu0 0.0
    %1662 = vmatpush1.msra.mxu0 0.0
    %1663 = vmatprep.subr.mxu0 0.0
    %1664 = vmatpush1.msra.mxu0 0.0
    %1665 = vmatprep.subr.mxu0 0.0
    %1666 = vmatpush1.msra.mxu0 0.0
    %1667 = vmatprep.subr.mxu0 0.0
    %1668 = vmatpush1.msra.mxu0 0.0
    %1669 = vmatprep.subr.mxu0 0.0
    %1670 = vmatpush1.msra.mxu0 0.0
    %1671 = vmatprep.subr.mxu0 0.0
    %1672 = vmatpush1.msra.mxu0 0.0
    %1673 = vmatprep.subr.mxu0 0.0
    %1674 = vmatpush1.msra.mxu0 0.0
    %1675 = vmatprep.subr.mxu0 0.0
    %1676 = vmatpush1.msra.mxu0 0.0
    %1677 = vmatprep.subr.mxu0 0.0
    %1678 = vmatpush1.msra.mxu0 0.0
    %1679 = vmatprep.subr.mxu0 0.0
    %1680 = vmatpush1.msra.mxu0 0.0
    %1681 = vmatprep.subr.mxu0 0.0
    %1682 = vmatpush1.msra.mxu0 0.0
    %1683 = vmatprep.subr.mxu0 0.0
    %1684 = vmatpush1.msra.mxu0 0.0
    %1685 = vmatprep.subr.mxu0 0.0
    %1686 = vmatpush1.msra.mxu0 0.0
    %1687 = vmatprep.subr.mxu0 0.0
    %1688 = vmatpush1.msra.mxu0 0.0
    %1689 = vmatprep.subr.mxu0 0.0
    %1690 = vmatpush1.msra.mxu0 0.0
    %1691 = vmatprep.subr.mxu0 0.0
    %1692 = vmatpush1.msra.mxu0 0.0
    %1693 = vmatprep.subr.mxu0 0.0
    %1694 = vmatpush1.msra.mxu0 0.0
    %1695 = vmatprep.subr.mxu0 0.0
    %1696 = vmatpush1.msra.mxu0 0.0
    %1697 = vmatprep.subr.mxu0 0.0
    %1698 = vmatpush1.msra.mxu0 0.0
    %1699 = vmatprep.subr.mxu0 0.0
    %1700 = vmatpush1.msra.mxu0 0.0
    %1701 = vmatprep.subr.mxu0 0.0
    %1702 = vmatpush1.msra.mxu0 0.0
    %1703 = vmatprep.subr.mxu0 0.0
    %1704 = vmatpush1.msra.mxu0 0.0
    %1705 = vmatprep.subr.mxu0 0.0
    %1706 = vmatpush1.msra.mxu0 0.0
    %1707 = vmatprep.subr.mxu0 0.0
    %1708 = vmatpush1.msra.mxu0 0.0
    %1709 = vmatprep.subr.mxu0 0.0
    %1710 = vmatpush1.msra.mxu0 0.0
    %1711 = vmatprep.subr.mxu0 0.0
    %1712 = vmatpush1.msra.mxu0 0.0
    %1713 = vmatprep.mubr.f32.mxu0 0.0
    %1714 = vmatmul.mubr.f32.gmra.mrb[0].mxu0 %v1638
    %v1715 = vpop.f32.mrb[0].mxu0
    %v1716 = vadd.f32 0.0, %v1715
    %v1717 = vpop.f32.mrb[0].mxu0
    %1718 = vmatprep.mubr.f32.mxu0 0.0
    %1719 = vmatmul.mubr.f32.gmra.mrb[0].mxu0 %v1641
    %v1720 = vpop.f32.mrb[0].mxu0
    %v1721 = vadd.f32 0.0, %v1720
    %v1722 = vpop.f32.mrb[0].mxu0
    %1723 = vmatprep.mubr.f32.mxu0 0.0
    %1724 = vmatmul.mubr.f32.gmra.mrb[0].mxu0 %v1644
    %v1725 = vpop.f32.mrb[0].mxu0
    %v1726 = vadd.f32 0.0, %v1725
    %v1727 = vpop.f32.mrb[0].mxu0
    %1728 = vmatprep.mubr.f32.mxu0 0.0
    %1729 = vmatmul.mubr.f32.gmra.mrb[0].mxu0 %v1647
    %v1730 = vpop.f32.mrb[0].mxu0
    %v1731 = vadd.f32 0.0, %v1730
    %v1732 = vpop.f32.mrb[0].mxu0
    %1733 = vdwg.mxu0
    %v1734 = vmul.f32 %v1716, %v25
    %v1735 = vmul.f32 %v1721, %v26
    %v1736 = vmul.f32 %v1726, %v27
    %v1737 = vmul.f32 %v1731, %v28
    %v1738 = vsel %vm33, %v1341, 0
    %v1740 = vsel %vm33, %v1342, 0
    %1742 = vmatprep.subr.mxu0 0.0
    %1743 = vmatpush1.msra.mxu0 %v1734
    %1744 = vmatprep.subr.mxu0 0.0
    %1745 = vmatpush1.msra.mxu0 %v1735
    %1746 = vmatprep.subr.mxu0 0.0
    %1747 = vmatpush1.msra.mxu0 %v1736
    %1748 = vmatprep.subr.mxu0 0.0
    %1749 = vmatpush1.msra.mxu0 %v1737
    %1750 = vmatprep.subr.mxu0 0.0
    %1751 = vmatpush1.msra.mxu0 0.0
    %1752 = vmatprep.subr.mxu0 0.0
    %1753 = vmatpush1.msra.mxu0 0.0
    %1754 = vmatprep.subr.mxu0 0.0
    %1755 = vmatpush1.msra.mxu0 0.0
    %1756 = vmatprep.subr.mxu0 0.0
    %1757 = vmatpush1.msra.mxu0 0.0
    %1758 = vmatprep.subr.mxu0 0.0
    %1759 = vmatpush1.msra.mxu0 0.0
    %1760 = vmatprep.subr.mxu0 0.0
    %1761 = vmatpush1.msra.mxu0 0.0
    %1762 = vmatprep.subr.mxu0 0.0
    %1763 = vmatpush1.msra.mxu0 0.0
    %1764 = vmatprep.subr.mxu0 0.0
    %1765 = vmatpush1.msra.mxu0 0.0
    %1766 = vmatprep.subr.mxu0 0.0
    %1767 = vmatpush1.msra.mxu0 0.0
    %1768 = vmatprep.subr.mxu0 0.0
    %1769 = vmatpush1.msra.mxu0 0.0
    %1770 = vmatprep.subr.mxu0 0.0
    %1771 = vmatpush1.msra.mxu0 0.0
    %1772 = vmatprep.subr.mxu0 0.0
    %1773 = vmatpush1.msra.mxu0 0.0
    %1774 = vmatprep.subr.mxu0 0.0
    %1775 = vmatpush1.msra.mxu0 0.0
    %1776 = vmatprep.subr.mxu0 0.0
    %1777 = vmatpush1.msra.mxu0 0.0
    %1778 = vmatprep.subr.mxu0 0.0
    %1779 = vmatpush1.msra.mxu0 0.0
    %1780 = vmatprep.subr.mxu0 0.0
    %1781 = vmatpush1.msra.mxu0 0.0
    %1782 = vmatprep.subr.mxu0 0.0
    %1783 = vmatpush1.msra.mxu0 0.0
    %1784 = vmatprep.subr.mxu0 0.0
    %1785 = vmatpush1.msra.mxu0 0.0
    %1786 = vmatprep.subr.mxu0 0.0
    %1787 = vmatpush1.msra.mxu0 0.0
    %1788 = vmatprep.subr.mxu0 0.0
    %1789 = vmatpush1.msra.mxu0 0.0
    %1790 = vmatprep.subr.mxu0 0.0
    %1791 = vmatpush1.msra.mxu0 0.0
    %1792 = vmatprep.subr.mxu0 0.0
    %1793 = vmatpush1.msra.mxu0 0.0
    %1794 = vmatprep.subr.mxu0 0.0
    %1795 = vmatpush1.msra.mxu0 0.0
    %1796 = vmatprep.subr.mxu0 0.0
    %1797 = vmatpush1.msra.mxu0 0.0
    %1798 = vmatprep.subr.mxu0 0.0
    %1799 = vmatpush1.msra.mxu0 0.0
    %1800 = vmatprep.subr.mxu0 0.0
    %1801 = vmatpush1.msra.mxu0 0.0
    %1802 = vmatprep.subr.mxu0 0.0
    %1803 = vmatpush1.msra.mxu0 0.0
    %1804 = vmatprep.subr.mxu0 0.0
    %1805 = vmatpush1.msra.mxu0 0.0
    %1806 = vmatprep.mubr.f32.mxu0 0.0
    %1807 = vmatmul.mubr.f32.gmra.mrb[0].mxu0 %v1738
    %v1808 = vpop.f32.mrb[0].mxu0
    %v1809 = vadd.f32 0.0, %v1808
    %v1810 = vpop.f32.mrb[0].mxu0
    %1811 = vmatprep.mubr.f32.mxu0 0.0
    %1812 = vmatmul.mubr.f32.gmra.mrb[0].mxu0 %v1740
    %v1813 = vpop.f32.mrb[0].mxu0
    %v1814 = vadd.f32 0.0, %v1813
    %v1815 = vpop.f32.mrb[0].mxu0
    %1816 = vdwg.mxu0
    %v1817 = vadd.f32 %v1809, 1e-06
    %v1818 = vadd.f32 %v1814, 1e-06
    %v1819 = vrcp.pop %v1817
    %v1820 = vrcp.pop %v1818
    %1823 = vrot.lane.b32.xlu0 %v1819, 96
    %v1824 = vpop.permute.xlu0 %1823
    %1825 = vrot.lane.b32.xlu0 %v1820, 96
    %v1826 = vpop.permute.xlu0 %1825
    %v1829 = vmul.f32 %v1809, %v1824
    %v1830 = vmul.f32 %v1814, %v1826
    %v1832 = vsel %vm33, %v1585, 0
    %v1835 = vsel %vm33, %v1586, 0
    %v1838 = vsel %vm33, %v1829, 0
    %v1841 = vsel %vm33, %v1830, 0
    %1843 = vmatprep.subr.mxu0 0.0
    %1844 = vmatpush1.msra.mxu0 %v649
    %1845 = vmatprep.subr.mxu0 0.0
    %1846 = vmatpush1.msra.mxu0 %v651
    %1847 = vmatprep.subr.mxu0 0.0
    %1848 = vmatpush1.msra.mxu0 %v653
    %1849 = vmatprep.subr.mxu0 0.0
    %1850 = vmatpush1.msra.mxu0 %v655
    %1851 = vmatprep.subr.mxu0 0.0
    %1852 = vmatpush1.msra.mxu0 0.0
    %1853 = vmatprep.subr.mxu0 0.0
    %1854 = vmatpush1.msra.mxu0 0.0
    %1855 = vmatprep.subr.mxu0 0.0
    %1856 = vmatpush1.msra.mxu0 0.0
    %1857 = vmatprep.subr.mxu0 0.0
    %1858 = vmatpush1.msra.mxu0 0.0
    %1859 = vmatprep.subr.mxu0 0.0
    %1860 = vmatpush1.msra.mxu0 0.0
    %1861 = vmatprep.subr.mxu0 0.0
    %1862 = vmatpush1.msra.mxu0 0.0
    %1863 = vmatprep.subr.mxu0 0.0
    %1864 = vmatpush1.msra.mxu0 0.0
    %1865 = vmatprep.subr.mxu0 0.0
    %1866 = vmatpush1.msra.mxu0 0.0
    %1867 = vmatprep.subr.mxu0 0.0
    %1868 = vmatpush1.msra.mxu0 0.0
    %1869 = vmatprep.subr.mxu0 0.0
    %1870 = vmatpush1.msra.mxu0 0.0
    %1871 = vmatprep.subr.mxu0 0.0
    %1872 = vmatpush1.msra.mxu0 0.0
    %1873 = vmatprep.subr.mxu0 0.0
    %1874 = vmatpush1.msra.mxu0 0.0
    %1875 = vmatprep.subr.mxu0 0.0
    %1876 = vmatpush1.msra.mxu0 0.0
    %1877 = vmatprep.subr.mxu0 0.0
    %1878 = vmatpush1.msra.mxu0 0.0
    %1879 = vmatprep.subr.mxu0 0.0
    %1880 = vmatpush1.msra.mxu0 0.0
    %1881 = vmatprep.subr.mxu0 0.0
    %1882 = vmatpush1.msra.mxu0 0.0
    %1883 = vmatprep.subr.mxu0 0.0
    %1884 = vmatpush1.msra.mxu0 0.0
    %1885 = vmatprep.subr.mxu0 0.0
    %1886 = vmatpush1.msra.mxu0 0.0
    %1887 = vmatprep.subr.mxu0 0.0
    %1888 = vmatpush1.msra.mxu0 0.0
    %1889 = vmatprep.subr.mxu0 0.0
    %1890 = vmatpush1.msra.mxu0 0.0
    %1891 = vmatprep.subr.mxu0 0.0
    %1892 = vmatpush1.msra.mxu0 0.0
    %1893 = vmatprep.subr.mxu0 0.0
    %1894 = vmatpush1.msra.mxu0 0.0
    %1895 = vmatprep.subr.mxu0 0.0
    %1896 = vmatpush1.msra.mxu0 0.0
    %1897 = vmatprep.subr.mxu0 0.0
    %1898 = vmatpush1.msra.mxu0 0.0
    %1899 = vmatprep.subr.mxu0 0.0
    %1900 = vmatpush1.msra.mxu0 0.0
    %1901 = vmatprep.subr.mxu0 0.0
    %1902 = vmatpush1.msra.mxu0 0.0
    %1903 = vmatprep.subr.mxu0 0.0
    %1904 = vmatpush1.msra.mxu0 0.0
    %1905 = vmatprep.subr.mxu0 0.0
    %1906 = vmatpush1.msra.mxu0 0.0
    %1907 = vmatprep.mubr.f32.mxu0 0.0
    %1908 = vmatmul.mubr.f32.gmra.mrb[0].mxu0 %v1832
    %v1909 = vpop.f32.mrb[0].mxu0
    %v1910 = vadd.f32 0.0, %v1909
    %v1911 = vpop.f32.mrb[0].mxu0
    %1912 = vmatprep.mubr.f32.mxu0 0.0
    %1913 = vmatmul.mubr.f32.gmra.mrb[0].mxu0 %v1835
    %v1914 = vpop.f32.mrb[0].mxu0
    %v1915 = vadd.f32 0.0, %v1914
    %v1916 = vpop.f32.mrb[0].mxu0
    %1917 = vmatprep.mubr.f32.mxu0 0.0
    %1918 = vmatmul.mubr.f32.gmra.mrb[0].mxu0 %v1838
    %v1919 = vpop.f32.mrb[0].mxu0
    %v1920 = vadd.f32 0.0, %v1919
    %v1921 = vpop.f32.mrb[0].mxu0
    %1922 = vmatprep.mubr.f32.mxu0 0.0
    %1923 = vmatmul.mubr.f32.gmra.mrb[0].mxu0 %v1841
    %v1924 = vpop.f32.mrb[0].mxu0
    %v1925 = vadd.f32 0.0, %v1924
    %v1926 = vpop.f32.mrb[0].mxu0
    %1927 = vdwg.mxu0
    %v1928 = vsel %vm33, %v1910, 0.0
    %1929 = vadd.xlane.f32.xlu0 %v1928
    %v1930 = vpop.xlane.xlu0 %1929
    %v1931 = vsel %vm33, %v1915, 0.0
    %1932 = vadd.xlane.f32.xlu0 %v1931
    %v1933 = vpop.xlane.xlu0 %1932
    %v1934 = vsel %vm33, %v1920, 0.0
    %1935 = vadd.xlane.f32.xlu0 %v1934
    %v1936 = vpop.xlane.xlu0 %1935
    %v1937 = vsel %vm33, %v1925, 0.0
    %1938 = vadd.xlane.f32.xlu0 %v1937
    %v1939 = vpop.xlane.xlu0 %1938
    %v1940 = vmul.f32 %v1930, %v771
    %v1941 = vmul.f32 %v1933, %v771
    %v1942 = vmul.f32 %v1936, %v771
    %v1943 = vmul.f32 %v1939, %v771
    %v1944 = vsub.f32 %v1910, %v1940
    %v1945 = vsub.f32 %v1915, %v1941
    %v1946 = vsub.f32 %v1920, %v1942
    %v1947 = vsub.f32 %v1925, %v1943
    %v1948 = vmul.f32 %v1944, %v1944
    %v1949 = vmul.f32 %v1945, %v1945
    %v1950 = vmul.f32 %v1946, %v1946
    %v1951 = vmul.f32 %v1947, %v1947
    %v1952 = vsel %vm33, %v1948, 0.0
    %1953 = vadd.xlane.f32.xlu0 %v1952
    %v1954 = vpop.xlane.xlu0 %1953
    %v1955 = vsel %vm33, %v1949, 0.0
    %1956 = vadd.xlane.f32.xlu0 %v1955
    %v1957 = vpop.xlane.xlu0 %1956
    %v1958 = vsel %vm33, %v1950, 0.0
    %1959 = vadd.xlane.f32.xlu0 %v1958
    %v1960 = vpop.xlane.xlu0 %1959
    %v1961 = vsel %vm33, %v1951, 0.0
    %1962 = vadd.xlane.f32.xlu0 %v1961
    %v1963 = vpop.xlane.xlu0 %1962
    %v1964 = vmul.f32 %v1954, %v771
    %v1965 = vmul.f32 %v1957, %v771
    %v1966 = vmul.f32 %v1960, %v771
    %v1967 = vmul.f32 %v1963, %v771
    %v1968 = vadd.f32 %v1964, 1e-05
    %v1969 = vadd.f32 %v1965, 1e-05
    %v1970 = vadd.f32 %v1966, 1e-05
    %v1971 = vadd.f32 %v1967, 1e-05
    %v1972 = vrsqrt.pop %v1968
    %v1973 = vrsqrt.pop %v1969
    %v1974 = vrsqrt.pop %v1970
    %v1975 = vrsqrt.pop %v1971
    %v1976 = vmul.f32 %v1944, %v1972
    %v1977 = vmul.f32 %v1945, %v1973
    %v1978 = vmul.f32 %v1946, %v1974
    %v1979 = vmul.f32 %v1947, %v1975
    %v1980 = vmul.f32 %v1976, %v815
    %v1981 = vmul.f32 %v1977, %v815
    %v1982 = vmul.f32 %v1978, %v815
    %v1983 = vmul.f32 %v1979, %v815
    %v1984 = vadd.f32 %v1980, %v823
    %v1985 = vadd.f32 %v1981, %v823
    %v1986 = vadd.f32 %v1982, %v823
    %v1987 = vadd.f32 %v1983, %v823
    %v1989 = vsel %vm33, %v1984, 0
    %v1992 = vsel %vm33, %v1985, 0
    %v1995 = vsel %vm33, %v1986, 0
    %v1998 = vsel %vm33, %v1987, 0
    %2000 = vmatprep.subr.mxu0 0.0
    %2001 = vmatpush1.msra.mxu0 %v837
    %2002 = vmatprep.subr.mxu0 0.0
    %2003 = vmatpush1.msra.mxu0 %v839
    %2004 = vmatprep.subr.mxu0 0.0
    %2005 = vmatpush1.msra.mxu0 %v841
    %2006 = vmatprep.subr.mxu0 0.0
    %2007 = vmatpush1.msra.mxu0 %v843
    %2008 = vmatprep.subr.mxu0 0.0
    %2009 = vmatpush1.msra.mxu0 0.0
    %2010 = vmatprep.subr.mxu0 0.0
    %2011 = vmatpush1.msra.mxu0 0.0
    %2012 = vmatprep.subr.mxu0 0.0
    %2013 = vmatpush1.msra.mxu0 0.0
    %2014 = vmatprep.subr.mxu0 0.0
    %2015 = vmatpush1.msra.mxu0 0.0
    %2016 = vmatprep.subr.mxu0 0.0
    %2017 = vmatpush1.msra.mxu0 0.0
    %2018 = vmatprep.subr.mxu0 0.0
    %2019 = vmatpush1.msra.mxu0 0.0
    %2020 = vmatprep.subr.mxu0 0.0
    %2021 = vmatpush1.msra.mxu0 0.0
    %2022 = vmatprep.subr.mxu0 0.0
    %2023 = vmatpush1.msra.mxu0 0.0
    %2024 = vmatprep.subr.mxu0 0.0
    %2025 = vmatpush1.msra.mxu0 0.0
    %2026 = vmatprep.subr.mxu0 0.0
    %2027 = vmatpush1.msra.mxu0 0.0
    %2028 = vmatprep.subr.mxu0 0.0
    %2029 = vmatpush1.msra.mxu0 0.0
    %2030 = vmatprep.subr.mxu0 0.0
    %2031 = vmatpush1.msra.mxu0 0.0
    %2032 = vmatprep.subr.mxu0 0.0
    %2033 = vmatpush1.msra.mxu0 0.0
    %2034 = vmatprep.subr.mxu0 0.0
    %2035 = vmatpush1.msra.mxu0 0.0
    %2036 = vmatprep.subr.mxu0 0.0
    %2037 = vmatpush1.msra.mxu0 0.0
    %2038 = vmatprep.subr.mxu0 0.0
    %2039 = vmatpush1.msra.mxu0 0.0
    %2040 = vmatprep.subr.mxu0 0.0
    %2041 = vmatpush1.msra.mxu0 0.0
    %2042 = vmatprep.subr.mxu0 0.0
    %2043 = vmatpush1.msra.mxu0 0.0
    %2044 = vmatprep.subr.mxu0 0.0
    %2045 = vmatpush1.msra.mxu0 0.0
    %2046 = vmatprep.subr.mxu0 0.0
    %2047 = vmatpush1.msra.mxu0 0.0
    %2048 = vmatprep.subr.mxu0 0.0
    %2049 = vmatpush1.msra.mxu0 0.0
    %2050 = vmatprep.subr.mxu0 0.0
    %2051 = vmatpush1.msra.mxu0 0.0
    %2052 = vmatprep.subr.mxu0 0.0
    %2053 = vmatpush1.msra.mxu0 0.0
    %2054 = vmatprep.subr.mxu0 0.0
    %2055 = vmatpush1.msra.mxu0 0.0
    %2056 = vmatprep.subr.mxu0 0.0
    %2057 = vmatpush1.msra.mxu0 0.0
    %2058 = vmatprep.subr.mxu0 0.0
    %2059 = vmatpush1.msra.mxu0 0.0
    %2060 = vmatprep.subr.mxu0 0.0
    %2061 = vmatpush1.msra.mxu0 0.0
    %2062 = vmatprep.subr.mxu0 0.0
    %2063 = vmatpush1.msra.mxu0 0.0
    %2064 = vmatprep.mubr.f32.mxu0 0.0
    %2065 = vmatmul.mubr.f32.gmra.mrb[0].mxu0 %v1989
    %v2066 = vpop.f32.mrb[0].mxu0
    %v2067 = vadd.f32 0.0, %v2066
    %v2068 = vpop.f32.mrb[0].mxu0
    %2069 = vmatprep.mubr.f32.mxu0 0.0
    %2070 = vmatmul.mubr.f32.gmra.mrb[0].mxu0 %v1992
    %v2071 = vpop.f32.mrb[0].mxu0
    %v2072 = vadd.f32 0.0, %v2071
    %v2073 = vpop.f32.mrb[0].mxu0
    %2074 = vmatprep.mubr.f32.mxu0 0.0
    %2075 = vmatmul.mubr.f32.gmra.mrb[0].mxu0 %v1995
    %v2076 = vpop.f32.mrb[0].mxu0
    %v2077 = vadd.f32 0.0, %v2076
    %v2078 = vpop.f32.mrb[0].mxu0
    %2079 = vmatprep.mubr.f32.mxu0 0.0
    %2080 = vmatmul.mubr.f32.gmra.mrb[0].mxu0 %v1998
    %v2081 = vpop.f32.mrb[0].mxu0
    %v2082 = vadd.f32 0.0, %v2081
    %v2083 = vpop.f32.mrb[0].mxu0
    %2084 = vdwg.mxu0
    %2085 = vmatprep.subr.mxu0 0.0
    %2086 = vmatpush1.msra.mxu0 %v828
    %2087 = vmatprep.subr.mxu0 0.0
    %2088 = vmatpush1.msra.mxu0 %v829
    %2089 = vmatprep.subr.mxu0 0.0
    %2090 = vmatpush1.msra.mxu0 %v830
    %2091 = vmatprep.subr.mxu0 0.0
    %2092 = vmatpush1.msra.mxu0 %v831
    %2093 = vmatprep.subr.mxu0 0.0
    %2094 = vmatpush1.msra.mxu0 0.0
    %2095 = vmatprep.subr.mxu0 0.0
    %2096 = vmatpush1.msra.mxu0 0.0
    %2097 = vmatprep.subr.mxu0 0.0
    %2098 = vmatpush1.msra.mxu0 0.0
    %2099 = vmatprep.subr.mxu0 0.0
    %2100 = vmatpush1.msra.mxu0 0.0
    %2101 = vmatprep.subr.mxu0 0.0
    %2102 = vmatpush1.msra.mxu0 0.0
    %2103 = vmatprep.subr.mxu0 0.0
    %2104 = vmatpush1.msra.mxu0 0.0
    %2105 = vmatprep.subr.mxu0 0.0
    %2106 = vmatpush1.msra.mxu0 0.0
    %2107 = vmatprep.subr.mxu0 0.0
    %2108 = vmatpush1.msra.mxu0 0.0
    %2109 = vmatprep.subr.mxu0 0.0
    %2110 = vmatpush1.msra.mxu0 0.0
    %2111 = vmatprep.subr.mxu0 0.0
    %2112 = vmatpush1.msra.mxu0 0.0
    %2113 = vmatprep.subr.mxu0 0.0
    %2114 = vmatpush1.msra.mxu0 0.0
    %2115 = vmatprep.subr.mxu0 0.0
    %2116 = vmatpush1.msra.mxu0 0.0
    %2117 = vmatprep.subr.mxu0 0.0
    %2118 = vmatpush1.msra.mxu0 0.0
    %2119 = vmatprep.subr.mxu0 0.0
    %2120 = vmatpush1.msra.mxu0 0.0
    %2121 = vmatprep.subr.mxu0 0.0
    %2122 = vmatpush1.msra.mxu0 0.0
    %2123 = vmatprep.subr.mxu0 0.0
    %2124 = vmatpush1.msra.mxu0 0.0
    %2125 = vmatprep.subr.mxu0 0.0
    %2126 = vmatpush1.msra.mxu0 0.0
    %2127 = vmatprep.subr.mxu0 0.0
    %2128 = vmatpush1.msra.mxu0 0.0
    %2129 = vmatprep.subr.mxu0 0.0
    %2130 = vmatpush1.msra.mxu0 0.0
    %2131 = vmatprep.subr.mxu0 0.0
    %2132 = vmatpush1.msra.mxu0 0.0
    %2133 = vmatprep.subr.mxu0 0.0
    %2134 = vmatpush1.msra.mxu0 0.0
    %2135 = vmatprep.subr.mxu0 0.0
    %2136 = vmatpush1.msra.mxu0 0.0
    %2137 = vmatprep.subr.mxu0 0.0
    %2138 = vmatpush1.msra.mxu0 0.0
    %2139 = vmatprep.subr.mxu0 0.0
    %2140 = vmatpush1.msra.mxu0 0.0
    %2141 = vmatprep.subr.mxu0 0.0
    %2142 = vmatpush1.msra.mxu0 0.0
    %2143 = vmatprep.subr.mxu0 0.0
    %2144 = vmatpush1.msra.mxu0 0.0
    %2145 = vmatprep.subr.mxu0 0.0
    %2146 = vmatpush1.msra.mxu0 0.0
    %2147 = vmatprep.subr.mxu0 0.0
    %2148 = vmatpush1.msra.mxu0 0.0
    %2149 = vmatprep.mubr.f32.mxu0 0.0
    %2150 = vmatmul.mubr.f32.gmra.mrb[0].mxu0 %v1223
    %v2151 = vpop.f32.mrb[0].mxu0
    %v2152 = vadd.f32 %v2067, %v2151
    %v2153 = vpop.f32.mrb[0].mxu0
    %2154 = vmatprep.mubr.f32.mxu0 0.0
    %2155 = vmatmul.mubr.f32.gmra.mrb[0].mxu0 %v1226
    %v2156 = vpop.f32.mrb[0].mxu0
    %v2157 = vadd.f32 %v2072, %v2156
    %v2158 = vpop.f32.mrb[0].mxu0
    %2159 = vmatprep.mubr.f32.mxu0 0.0
    %2160 = vmatmul.mubr.f32.gmra.mrb[0].mxu0 %v1229
    %v2161 = vpop.f32.mrb[0].mxu0
    %v2162 = vadd.f32 %v2077, %v2161
    %v2163 = vpop.f32.mrb[0].mxu0
    %2164 = vmatprep.mubr.f32.mxu0 0.0
    %2165 = vmatmul.mubr.f32.gmra.mrb[0].mxu0 %v1232
    %v2166 = vpop.f32.mrb[0].mxu0
    %v2167 = vadd.f32 %v2082, %v2166
    %v2168 = vpop.f32.mrb[0].mxu0
    %2169 = vdwg.mxu0
    %vm2170 = vcmp.gt.f32.partialorder %v2152, 0.0
    %vm2171 = vcmp.gt.f32.partialorder %v2157, 0.0
    %vm2172 = vcmp.gt.f32.partialorder %v2162, 0.0
    %vm2173 = vcmp.gt.f32.partialorder %v2167, 0.0
    %v2174 = vmul.f32 %v2152, 0.1
    %v2175 = vmul.f32 %v2157, 0.1
    %v2176 = vmul.f32 %v2162, 0.1
    %v2177 = vmul.f32 %v2167, 0.1
    %v2178 = vsel %vm2170, %v2152, %v2174
    %v2179 = vsel %vm2171, %v2157, %v2175
    %v2180 = vsel %vm2172, %v2162, %v2176
    %v2181 = vsel %vm2173, %v2167, %v2177
    %v2183 = vsel %vm1050, %v2178, 0
    %v2186 = vsel %vm1050, %v2179, 0
    %v2189 = vsel %vm1050, %v2180, 0
    %v2192 = vsel %vm1050, %v2181, 0
    %2194 = vmatprep.subr.mxu0 0.0
    %2195 = vmatpush1.msra.mxu0 %v1042
    %2196 = vmatprep.subr.mxu0 0.0
    %2197 = vmatpush1.msra.mxu0 %v1043
    %2198 = vmatprep.subr.mxu0 0.0
    %2199 = vmatpush1.msra.mxu0 %v1044
    %2200 = vmatprep.subr.mxu0 0.0
    %2201 = vmatpush1.msra.mxu0 %v1045
    %2202 = vmatprep.subr.mxu0 0.0
    %2203 = vmatpush1.msra.mxu0 %v1046
    %2204 = vmatprep.subr.mxu0 0.0
    %2205 = vmatpush1.msra.mxu0 %v1047
    %2206 = vmatprep.subr.mxu0 0.0
    %2207 = vmatpush1.msra.mxu0 %v1048
    %2208 = vmatprep.subr.mxu0 0.0
    %2209 = vmatpush1.msra.mxu0 %v1049
    %2210 = vmatprep.subr.mxu0 0.0
    %2211 = vmatpush1.msra.mxu0 0.0
    %2212 = vmatprep.subr.mxu0 0.0
    %2213 = vmatpush1.msra.mxu0 0.0
    %2214 = vmatprep.subr.mxu0 0.0
    %2215 = vmatpush1.msra.mxu0 0.0
    %2216 = vmatprep.subr.mxu0 0.0
    %2217 = vmatpush1.msra.mxu0 0.0
    %2218 = vmatprep.subr.mxu0 0.0
    %2219 = vmatpush1.msra.mxu0 0.0
    %2220 = vmatprep.subr.mxu0 0.0
    %2221 = vmatpush1.msra.mxu0 0.0
    %2222 = vmatprep.subr.mxu0 0.0
    %2223 = vmatpush1.msra.mxu0 0.0
    %2224 = vmatprep.subr.mxu0 0.0
    %2225 = vmatpush1.msra.mxu0 0.0
    %2226 = vmatprep.subr.mxu0 0.0
    %2227 = vmatpush1.msra.mxu0 0.0
    %2228 = vmatprep.subr.mxu0 0.0
    %2229 = vmatpush1.msra.mxu0 0.0
    %2230 = vmatprep.subr.mxu0 0.0
    %2231 = vmatpush1.msra.mxu0 0.0
    %2232 = vmatprep.subr.mxu0 0.0
    %2233 = vmatpush1.msra.mxu0 0.0
    %2234 = vmatprep.subr.mxu0 0.0
    %2235 = vmatpush1.msra.mxu0 0.0
    %2236 = vmatprep.subr.mxu0 0.0
    %2237 = vmatpush1.msra.mxu0 0.0
    %2238 = vmatprep.subr.mxu0 0.0
    %2239 = vmatpush1.msra.mxu0 0.0
    %2240 = vmatprep.subr.mxu0 0.0
    %2241 = vmatpush1.msra.mxu0 0.0
    %2242 = vmatprep.subr.mxu0 0.0
    %2243 = vmatpush1.msra.mxu0 0.0
    %2244 = vmatprep.subr.mxu0 0.0
    %2245 = vmatpush1.msra.mxu0 0.0
    %2246 = vmatprep.subr.mxu0 0.0
    %2247 = vmatpush1.msra.mxu0 0.0
    %2248 = vmatprep.subr.mxu0 0.0
    %2249 = vmatpush1.msra.mxu0 0.0
    %2250 = vmatprep.subr.mxu0 0.0
    %2251 = vmatpush1.msra.mxu0 0.0
    %2252 = vmatprep.subr.mxu0 0.0
    %2253 = vmatpush1.msra.mxu0 0.0
    %2254 = vmatprep.subr.mxu0 0.0
    %2255 = vmatpush1.msra.mxu0 0.0
    %2256 = vmatprep.subr.mxu0 0.0
    %2257 = vmatpush1.msra.mxu0 0.0
    %2258 = vmatprep.mubr.f32.mxu0 0.0
    %2259 = vmatmul.mubr.f32.gmra.mrb[0].mxu0 %v2183
    %v2260 = vpop.f32.mrb[0].mxu0
    %v2261 = vadd.f32 0.0, %v2260
    %v2262 = vpop.f32.mrb[0].mxu0
    %2263 = vmatprep.mubr.f32.mxu0 0.0
    %2264 = vmatmul.mubr.f32.gmra.mrb[0].mxu0 %v2186
    %v2265 = vpop.f32.mrb[0].mxu0
    %v2266 = vadd.f32 0.0, %v2265
    %v2267 = vpop.f32.mrb[0].mxu0
    %2268 = vmatprep.mubr.f32.mxu0 0.0
    %2269 = vmatmul.mubr.f32.gmra.mrb[0].mxu0 %v2189
    %v2270 = vpop.f32.mrb[0].mxu0
    %v2271 = vadd.f32 0.0, %v2270
    %v2272 = vpop.f32.mrb[0].mxu0
    %2273 = vmatprep.mubr.f32.mxu0 0.0
    %2274 = vmatmul.mubr.f32.gmra.mrb[0].mxu0 %v2192
    %v2275 = vpop.f32.mrb[0].mxu0
    %v2276 = vadd.f32 0.0, %v2275
    %v2277 = vpop.f32.mrb[0].mxu0
    %2278 = vdwg.mxu0
    %v2279 = vsel %vm33, %v2261, 0.0
    %2280 = vadd.xlane.f32.xlu0 %v2279
    %v2281 = vpop.xlane.xlu0 %2280
    %v2282 = vsel %vm33, %v2266, 0.0
    %2283 = vadd.xlane.f32.xlu0 %v2282
    %v2284 = vpop.xlane.xlu0 %2283
    %v2285 = vsel %vm33, %v2271, 0.0
    %2286 = vadd.xlane.f32.xlu0 %v2285
    %v2287 = vpop.xlane.xlu0 %2286
    %v2288 = vsel %vm33, %v2276, 0.0
    %2289 = vadd.xlane.f32.xlu0 %v2288
    %v2290 = vpop.xlane.xlu0 %2289
    %v2291 = vmul.f32 %v2281, %v771
    %v2292 = vmul.f32 %v2284, %v771
    %v2293 = vmul.f32 %v2287, %v771
    %v2294 = vmul.f32 %v2290, %v771
    %v2295 = vsub.f32 %v2261, %v2291
    %v2296 = vsub.f32 %v2266, %v2292
    %v2297 = vsub.f32 %v2271, %v2293
    %v2298 = vsub.f32 %v2276, %v2294
    %v2299 = vmul.f32 %v2295, %v2295
    %v2300 = vmul.f32 %v2296, %v2296
    %v2301 = vmul.f32 %v2297, %v2297
    %v2302 = vmul.f32 %v2298, %v2298
    %v2303 = vsel %vm33, %v2299, 0.0
    %2304 = vadd.xlane.f32.xlu0 %v2303
    %v2305 = vpop.xlane.xlu0 %2304
    %v2306 = vsel %vm33, %v2300, 0.0
    %2307 = vadd.xlane.f32.xlu0 %v2306
    %v2308 = vpop.xlane.xlu0 %2307
    %v2309 = vsel %vm33, %v2301, 0.0
    %2310 = vadd.xlane.f32.xlu0 %v2309
    %v2311 = vpop.xlane.xlu0 %2310
    %v2312 = vsel %vm33, %v2302, 0.0
    %2313 = vadd.xlane.f32.xlu0 %v2312
    %v2314 = vpop.xlane.xlu0 %2313
    %v2315 = vmul.f32 %v2305, %v771
    %v2316 = vmul.f32 %v2308, %v771
    %v2317 = vmul.f32 %v2311, %v771
    %v2318 = vmul.f32 %v2314, %v771
    %v2319 = vadd.f32 %v2315, 1e-05
    %v2320 = vadd.f32 %v2316, 1e-05
    %v2321 = vadd.f32 %v2317, 1e-05
    %v2322 = vadd.f32 %v2318, 1e-05
    %v2323 = vrsqrt.pop %v2319
    %v2324 = vrsqrt.pop %v2320
    %v2325 = vrsqrt.pop %v2321
    %v2326 = vrsqrt.pop %v2322
    %v2327 = vmul.f32 %v2295, %v2323
    %v2328 = vmul.f32 %v2296, %v2324
    %v2329 = vmul.f32 %v2297, %v2325
    %v2330 = vmul.f32 %v2298, %v2326
    %v2331 = vmul.f32 %v2327, %v1205
    %v2332 = vmul.f32 %v2328, %v1205
    %v2333 = vmul.f32 %v2329, %v1205
    %v2334 = vmul.f32 %v2330, %v1205
    %v2335 = vadd.f32 %v2331, %v1213
    %v2336 = vadd.f32 %v2332, %v1213
    %v2337 = vadd.f32 %v2333, %v1213
    %v2338 = vadd.f32 %v2334, %v1213
    %v2339 = vadd.f32 %v1218, %v2335
    %v2340 = vadd.f32 %v1219, %v2336
    %v2341 = vadd.f32 %v1220, %v2337
    %v2342 = vadd.f32 %v1221, %v2338
    %2343 = vst.msk [vmem:[#allocation2] sm:$0xff] %vm33, %v2339
    %2344 = vst.msk [vmem:[#allocation2 + $0x8] sm:$0xff] %vm33, %v2340
    %2345 = vst.msk [vmem:[#allocation2 + $0x10] sm:$0xff] %vm33, %v2341
    %2346 = vst.msk [vmem:[#allocation2 + $0x18] sm:$0xff] %vm33, %v2342
    // Predicated region
    $region22: #{view_transformer_pallas.1} parent=1 // pred_check
      _
    $region23: #{view_transformer_pallas.1} parent=1 // pred_check_branch
      %2348 = sbr.rel (0) target = $region25
    $region24: #{view_transformer_pallas.1} parent=1 // pred_region
      %s2350 = ssub.s32 512, 512
      %2351 = vsyncadd [#allocation3], %s2350
      %s2352 = sshll.u32 [#allocation2], 4
      %s2353 = int_to_ptr.vmem [resolvable:$true] %s2352
      %2358 = dma.vmem_to_hbm [thread:$0]  %s2353, 512, %s5, [#allocation3], 128, 128, 8
    $region25: #{view_transformer_pallas.1} parent=1 // pred_fallthru
      _
    // Predicated region
    $region26: #{view_transformer_pallas.1} parent=1 // pred_check
      _
    $region27: #{view_transformer_pallas.1} parent=1 // pred_check_branch
      %2360 = sbr.rel (0) target = $region29
    $region28: #{view_transformer_pallas.1} parent=1 // pred_region
      %2361 = dma.done [#allocation3], 512
    $region29: #{view_transformer_pallas.1} parent=1 // pred_fallthru
      _
    %2362 = vsyncpa [#allocation3], 1

</llo_original>
